<compile_context>
chip_gen: v6e
topology: v6e:2x2x1
jax: 0.10.0
libtpu: 0.0.40
codegen_flags: <defaults>
</compile_context>

<pallas_src>
import jax
import jax.numpy as jnp
import numpy as np
from jax import lax
from jax.experimental import pallas as pl
from jax.experimental.pallas import tpu as pltpu

EPS = 1e-5  # PyTorch InstanceNorm2d default

_PHASES = ((0, 0), (0, 1), (1, 0), (1, 1))   # (py, px), phase index p = 2*py + px
_TAPS   = ((0, 0), (0, 1), (1, 0), (1, 1))   # (a, b),   tap index   t = 2*a + b


def _make_kernel(cout, W, HW, n_pix_total):
    inv_n = 1.0 / float(n_pix_total)

    def kernel(x_ref, m_ref, w_ref, o_ref):
        # x_ref: (1, Cin, HW) f32   m_ref: (9, 1, HW) f32
        # w_ref: (16, Cout, Cin) bf16   o_ref: (1, 4, Cout, HW) f32
        x = x_ref[0]                                   # (Cin, HW)

        # Build the 9 distinct shifted views of x (d = dy*3 + dx corresponds to
        # reading padded pixel (iy+dy, ix+dx)).  Shift is a static lane rotate;
        # the host-precomputed mask zeroes lanes that came from the zero-pad
        # (row wrap / top / bottom).
        xs = []
        for dy in range(3):
            for dx in range(3):
                off = (dy - 1) * W + (dx - 1)
                d = dy * 3 + dx
                v = x if off == 0 else pltpu.roll(x, shift=(-off) % HW, axis=1)
                if d != 4:
                    v = v * m_ref[d]
                xs.append(v.astype(jnp.bfloat16))

        psum = jnp.zeros((cout, 1), jnp.float32)
        psqr = jnp.zeros((cout, 1), jnp.float32)
        # ConvTranspose2d as 4 phases x 4 taps = 16 zero-free matmuls (bf16 in,
        # f32 acc on the MXU); InstanceNorm statistics accumulated in-pass.
        for p, (py, px) in enumerate(_PHASES):
            acc = jnp.zeros((cout, HW), jnp.float32)
            for t, (a, b) in enumerate(_TAPS):
                d = (py + a) * 3 + (px + b)
                acc = acc + jnp.dot(w_ref[4 * p + t], xs[d],
                                    preferred_element_type=jnp.float32)
            o_ref[0, p] = acc                          # raw conv, revisited below
            psum = psum + jnp.sum(acc, axis=1, keepdims=True)
            psqr = psqr + jnp.sum(acc * acc, axis=1, keepdims=True)

        mean = psum * inv_n
        var = psqr * inv_n - mean * mean               # biased variance
        scale = lax.rsqrt(var + EPS)
        # normalize + ReLU while the output block is still VMEM-resident
        for p in range(4):
            o_ref[0, p] = jnp.maximum((o_ref[0, p] - mean) * scale, 0.0)

    return kernel


def unet_up(x, skip, weight):
    """x: (N, Cin, H, W) f32, skip: (N, Cskip, 2H, 2W) f32,
    weight: (Cin, Cout, 4, 4) f32 (PyTorch ConvTranspose2d layout)."""
    N, Cin, H, W = x.shape
    Cout = weight.shape[1]
    OH, OW = 2 * H, 2 * W
    HW = H * W

    # --- host glue (all O(params) or a free reshape) -------------------------
    x_flat = x.reshape(N, Cin, HW)                     # no data blowup

    # Boundary-validity masks for the 9 shifts (static given H, W).
    iy = np.repeat(np.arange(H), W)
    ix = np.tile(np.arange(W), H)
    masks = np.zeros((9, 1, HW), np.float32)
    for dy in range(3):
        for dx in range(3):
            valid = ((iy + dy - 1 >= 0) & (iy + dy - 1 < H) &
                     (ix + dx - 1 >= 0) & (ix + dx - 1 < W))
            masks[dy * 3 + dx, 0] = valid.astype(np.float32)
    masks = jnp.asarray(masks)

    # Per-(phase, tap) weight matrices.  Output pixel (2*iy+py, 2*ix+px) only
    # sees taps kh = 2a+py, kw = 2b+px (a, b in {0,1}) applied to padded input
    # pixel (iy+py+a, ix+px+b); ConvTranspose uses the flipped kernel index.
    wrows = []
    for py, px in _PHASES:
        for a, b in _TAPS:
            wrows.append(weight[:, :, 3 - (2 * a + py), 3 - (2 * b + px)].T)  # (Cout, Cin)
    wmat = jnp.stack(wrows, axis=0).astype(jnp.bfloat16)                      # (16, Cout, Cin)

    # --- Pallas kernel: conv-transpose + InstanceNorm + ReLU, one image per
    # grid step (whole image VMEM-resident).
    # TODO(synk): for very large decoder images, tile HW (streamed sum/sumsq +
    # finalize pass) so blocks fit v7x's 64 MiB VMEM.
    kernel = _make_kernel(Cout, W, HW, OH * OW)
    y = pl.pallas_call(
        kernel,
        out_shape=jax.ShapeDtypeStruct((N, 4, Cout, HW), jnp.float32),
        grid_spec=pltpu.PrefetchScalarGridSpec(
            num_scalar_prefetch=0,
            grid=(N,),
            in_specs=[
                pl.BlockSpec((1, Cin, HW), lambda n: (n, 0, 0)),
                pl.BlockSpec((9, 1, HW), lambda n: (0, 0, 0)),
                pl.BlockSpec((16, Cout, Cin), lambda n: (0, 0, 0)),
            ],
            out_specs=pl.BlockSpec((1, 4, Cout, HW), lambda n: (n, 0, 0, 0)),
        ),
        compiler_params=pltpu.CompilerParams(
            dimension_semantics=("parallel",),
            vmem_limit_bytes=32 * 1024 * 1024),
    )(x_flat, masks, wmat)

    # --- epilogue: depth-to-space the 4 phases back to NCHW and concat skip.
    # TODO(synk): fuse this pixel-shuffle + concat into the kernel via in-kernel
    # lane interleave / aliased output to drop the extra output pass.
    y = y.reshape(N, 2, 2, Cout, H, W).transpose(0, 3, 4, 1, 5, 2)
    y = y.reshape(N, Cout, OH, OW)
    return jnp.concatenate([y, skip], axis=1)


def _reference(x, skip, weight):
    # pure-JAX reference of the PyTorch forward
    w_t = weight[:, :, ::-1, ::-1].transpose(1, 0, 2, 3)   # (Cout, Cin, 4, 4)
    y = lax.conv_general_dilated(
        x, w_t, window_strides=(1, 1), padding=[(2, 2), (2, 2)],
        lhs_dilation=(2, 2),
        dimension_numbers=('NCHW', 'OIHW', 'NCHW'),
        precision=lax.Precision.HIGHEST)
    mean = jnp.mean(y, axis=(2, 3), keepdims=True)
    var = jnp.mean(jnp.square(y - mean), axis=(2, 3), keepdims=True)
    y = jnp.maximum((y - mean) * lax.rsqrt(var + EPS), 0.0)
    return jnp.concatenate([y, skip], axis=1)


if __name__ == "__main__":
    key = jax.random.PRNGKey(0)
    k_x, k_s, k_w = jax.random.split(key, 3)

    N, Cin, Cout, H, W = 2, 8, 8, 16, 16        # output spatial = 32x32, HW = 256
    Cskip = Cout                                 # typical UNet skip

    x = jax.random.normal(k_x, (N, Cin, H, W), jnp.float32)
    skip = jax.random.normal(k_s, (N, Cskip, 2 * H, 2 * W), jnp.float32)
    # deterministic "ConvTranspose2d" weight, PyTorch layout (Cin, Cout, KH, KW)
    weight = 0.1 * jax.random.normal(k_w, (Cin, Cout, 4, 4), jnp.float32)
    # TODO(synk): dropout branch omitted (module default dropout=0.0 -> no layer).

    out = jax.block_until_ready(jax.jit(unet_up)(x, skip, weight))
    ref = jax.block_until_ready(_reference(x, skip, weight))

    assert out.shape == (N, Cout + Cskip, 2 * H, 2 * W), out.shape
    # bf16 MXU operands (f32 accumulation) vs. f32-HIGHEST reference.
    np.testing.assert_allclose(np.asarray(out), np.asarray(ref),
                               rtol=3e-2, atol=3e-2)
    print("KERNEL_OK")
</pallas_src>

<mosaic_0001>
module attributes {stable_mosaic.version = 11 : i64} {
  func.func @kernel(%arg0: i32, %arg1: memref<1x8x256xf32, #tpu.memory_space<vmem>>, %arg2: memref<9x1x256xf32, #tpu.memory_space<vmem>>, %arg3: memref<16x8x8xbf16, #tpu.memory_space<vmem>>, %arg4: memref<1x4x8x256xf32, #tpu.memory_space<vmem>>) attributes {dimension_semantics = [#tpu.dimension_semantics<parallel>], iteration_bounds = array<i64: 2>, scalar_prefetch = 0 : i64, scratch_operands = 0 : i64, tpu.core_type = #tpu.core_type<tc>, window_params = [{transform_indices = @transform_0, window_bounds = array<i64: 1, 8, 256>}, {pipeline_mode = #tpu.pipeline_mode<synchronous>, transform_indices = @transform_1, window_bounds = array<i64: 9, 1, 256>}, {pipeline_mode = #tpu.pipeline_mode<synchronous>, transform_indices = @transform_2, window_bounds = array<i64: 16, 8, 8>}, {transform_indices = @transform_3, window_bounds = array<i64: 1, 4, 8, 256>}]} {
    %c0 = arith.constant 0 : index
    %c0_0 = arith.constant 0 : index
    %c0_1 = arith.constant 0 : index
    %0 = vector.load %arg1[%c0, %c0_0, %c0_1] : memref<1x8x256xf32, #tpu.memory_space<vmem>>, vector<1x8x256xf32>
    %1 = vector.shape_cast %0 : vector<1x8x256xf32> to vector<8x256xf32>
    %c17_i32 = arith.constant 17 : i32
    %2 = tpu.dynamic_rotate %1 by %c17_i32 dim 1 : vector<8x256xf32>, i32 -> vector<8x256xf32>
    %c0_2 = arith.constant 0 : index
    %c0_3 = arith.constant 0 : index
    %c0_4 = arith.constant 0 : index
    %3 = vector.load %arg2[%c0_2, %c0_3, %c0_4] : memref<9x1x256xf32, #tpu.memory_space<vmem>>, vector<1x1x256xf32>
    %4 = vector.shape_cast %3 : vector<1x1x256xf32> to vector<1x256xf32>
    %5 = vector.broadcast %4 : vector<1x256xf32> to vector<8x256xf32>
    %6 = arith.mulf %2, %5 : vector<8x256xf32>
    %7 = arith.truncf %6 : vector<8x256xf32> to vector<8x256xbf16>
    %c16_i32 = arith.constant 16 : i32
    %8 = tpu.dynamic_rotate %1 by %c16_i32 dim 1 : vector<8x256xf32>, i32 -> vector<8x256xf32>
    %c1 = arith.constant 1 : index
    %c0_5 = arith.constant 0 : index
    %c0_6 = arith.constant 0 : index
    %9 = vector.load %arg2[%c1, %c0_5, %c0_6] : memref<9x1x256xf32, #tpu.memory_space<vmem>>, vector<1x1x256xf32>
    %10 = vector.shape_cast %9 : vector<1x1x256xf32> to vector<1x256xf32>
    %11 = vector.broadcast %10 : vector<1x256xf32> to vector<8x256xf32>
    %12 = arith.mulf %8, %11 : vector<8x256xf32>
    %13 = arith.truncf %12 : vector<8x256xf32> to vector<8x256xbf16>
    %c15_i32 = arith.constant 15 : i32
    %14 = tpu.dynamic_rotate %1 by %c15_i32 dim 1 : vector<8x256xf32>, i32 -> vector<8x256xf32>
    %c2 = arith.constant 2 : index
    %c0_7 = arith.constant 0 : index
    %c0_8 = arith.constant 0 : index
    %15 = vector.load %arg2[%c2, %c0_7, %c0_8] : memref<9x1x256xf32, #tpu.memory_space<vmem>>, vector<1x1x256xf32>
    %16 = vector.shape_cast %15 : vector<1x1x256xf32> to vector<1x256xf32>
    %17 = vector.broadcast %16 : vector<1x256xf32> to vector<8x256xf32>
    %18 = arith.mulf %14, %17 : vector<8x256xf32>
    %19 = arith.truncf %18 : vector<8x256xf32> to vector<8x256xbf16>
    %c1_i32 = arith.constant 1 : i32
    %20 = tpu.dynamic_rotate %1 by %c1_i32 dim 1 : vector<8x256xf32>, i32 -> vector<8x256xf32>
    %c3 = arith.constant 3 : index
    %c0_9 = arith.constant 0 : index
    %c0_10 = arith.constant 0 : index
    %21 = vector.load %arg2[%c3, %c0_9, %c0_10] : memref<9x1x256xf32, #tpu.memory_space<vmem>>, vector<1x1x256xf32>
    %22 = vector.shape_cast %21 : vector<1x1x256xf32> to vector<1x256xf32>
    %23 = vector.broadcast %22 : vector<1x256xf32> to vector<8x256xf32>
    %24 = arith.mulf %20, %23 : vector<8x256xf32>
    %25 = arith.truncf %24 : vector<8x256xf32> to vector<8x256xbf16>
    %26 = arith.truncf %1 : vector<8x256xf32> to vector<8x256xbf16>
    %c255_i32 = arith.constant 255 : i32
    %27 = tpu.dynamic_rotate %1 by %c255_i32 dim 1 : vector<8x256xf32>, i32 -> vector<8x256xf32>
    %c5 = arith.constant 5 : index
    %c0_11 = arith.constant 0 : index
    %c0_12 = arith.constant 0 : index
    %28 = vector.load %arg2[%c5, %c0_11, %c0_12] : memref<9x1x256xf32, #tpu.memory_space<vmem>>, vector<1x1x256xf32>
    %29 = vector.shape_cast %28 : vector<1x1x256xf32> to vector<1x256xf32>
    %30 = vector.broadcast %29 : vector<1x256xf32> to vector<8x256xf32>
    %31 = arith.mulf %27, %30 : vector<8x256xf32>
    %32 = arith.truncf %31 : vector<8x256xf32> to vector<8x256xbf16>
    %c241_i32 = arith.constant 241 : i32
    %33 = tpu.dynamic_rotate %1 by %c241_i32 dim 1 : vector<8x256xf32>, i32 -> vector<8x256xf32>
    %c6 = arith.constant 6 : index
    %c0_13 = arith.constant 0 : index
    %c0_14 = arith.constant 0 : index
    %34 = vector.load %arg2[%c6, %c0_13, %c0_14] : memref<9x1x256xf32, #tpu.memory_space<vmem>>, vector<1x1x256xf32>
    %35 = vector.shape_cast %34 : vector<1x1x256xf32> to vector<1x256xf32>
    %36 = vector.broadcast %35 : vector<1x256xf32> to vector<8x256xf32>
    %37 = arith.mulf %33, %36 : vector<8x256xf32>
    %38 = arith.truncf %37 : vector<8x256xf32> to vector<8x256xbf16>
    %c240_i32 = arith.constant 240 : i32
    %39 = tpu.dynamic_rotate %1 by %c240_i32 dim 1 : vector<8x256xf32>, i32 -> vector<8x256xf32>
    %c7 = arith.constant 7 : index
    %c0_15 = arith.constant 0 : index
    %c0_16 = arith.constant 0 : index
    %40 = vector.load %arg2[%c7, %c0_15, %c0_16] : memref<9x1x256xf32, #tpu.memory_space<vmem>>, vector<1x1x256xf32>
    %41 = vector.shape_cast %40 : vector<1x1x256xf32> to vector<1x256xf32>
    %42 = vector.broadcast %41 : vector<1x256xf32> to vector<8x256xf32>
    %43 = arith.mulf %39, %42 : vector<8x256xf32>
    %44 = arith.truncf %43 : vector<8x256xf32> to vector<8x256xbf16>
    %c239_i32 = arith.constant 239 : i32
    %45 = tpu.dynamic_rotate %1 by %c239_i32 dim 1 : vector<8x256xf32>, i32 -> vector<8x256xf32>
    %c8 = arith.constant 8 : index
    %c0_17 = arith.constant 0 : index
    %c0_18 = arith.constant 0 : index
    %46 = vector.load %arg2[%c8, %c0_17, %c0_18] : memref<9x1x256xf32, #tpu.memory_space<vmem>>, vector<1x1x256xf32>
    %47 = vector.shape_cast %46 : vector<1x1x256xf32> to vector<1x256xf32>
    %48 = vector.broadcast %47 : vector<1x256xf32> to vector<8x256xf32>
    %49 = arith.mulf %45, %48 : vector<8x256xf32>
    %50 = arith.truncf %49 : vector<8x256xf32> to vector<8x256xbf16>
    %cst = arith.constant 0.000000e+00 : f32
    %51 = vector.broadcast %cst : f32 to vector<8x1xf32>
    %cst_19 = arith.constant 0.000000e+00 : f32
    %52 = vector.broadcast %cst_19 : f32 to vector<8x1xf32>
    %cst_20 = arith.constant 0.000000e+00 : f32
    %53 = vector.broadcast %cst_20 : f32 to vector<8x256xf32>
    %c0_21 = arith.constant 0 : index
    %c0_22 = arith.constant 0 : index
    %c0_23 = arith.constant 0 : index
    %54 = vector.load %arg3[%c0_21, %c0_22, %c0_23] : memref<16x8x8xbf16, #tpu.memory_space<vmem>>, vector<1x8x8xbf16>
    %55 = vector.shape_cast %54 : vector<1x8x8xbf16> to vector<8x8xbf16>
    %cst_24 = arith.constant dense<0.000000e+00> : vector<8x256xf32>
    %56 = tpu.matmul %55, %7, %cst_24 {dimension_numbers = #tpu.dot_dimension_numbers<[1], [0], [0], [1], [0, 0, 1, 1], [], []>} : vector<8x8xbf16>, vector<8x256xbf16>, vector<8x256xf32> -> vector<8x256xf32>
    %57 = arith.addf %53, %56 : vector<8x256xf32>
    %c1_25 = arith.constant 1 : index
    %c0_26 = arith.constant 0 : index
    %c0_27 = arith.constant 0 : index
    %58 = vector.load %arg3[%c1_25, %c0_26, %c0_27] : memref<16x8x8xbf16, #tpu.memory_space<vmem>>, vector<1x8x8xbf16>
    %59 = vector.shape_cast %58 : vector<1x8x8xbf16> to vector<8x8xbf16>
    %cst_28 = arith.constant dense<0.000000e+00> : vector<8x256xf32>
    %60 = tpu.matmul %59, %13, %cst_28 {dimension_numbers = #tpu.dot_dimension_numbers<[1], [0], [0], [1], [0, 0, 1, 1], [], []>} : vector<8x8xbf16>, vector<8x256xbf16>, vector<8x256xf32> -> vector<8x256xf32>
    %61 = arith.addf %57, %60 : vector<8x256xf32>
    %c2_29 = arith.constant 2 : index
    %c0_30 = arith.constant 0 : index
    %c0_31 = arith.constant 0 : index
    %62 = vector.load %arg3[%c2_29, %c0_30, %c0_31] : memref<16x8x8xbf16, #tpu.memory_space<vmem>>, vector<1x8x8xbf16>
    %63 = vector.shape_cast %62 : vector<1x8x8xbf16> to vector<8x8xbf16>
    %cst_32 = arith.constant dense<0.000000e+00> : vector<8x256xf32>
    %64 = tpu.matmul %63, %25, %cst_32 {dimension_numbers = #tpu.dot_dimension_numbers<[1], [0], [0], [1], [0, 0, 1, 1], [], []>} : vector<8x8xbf16>, vector<8x256xbf16>, vector<8x256xf32> -> vector<8x256xf32>
    %65 = arith.addf %61, %64 : vector<8x256xf32>
    %c3_33 = arith.constant 3 : index
    %c0_34 = arith.constant 0 : index
    %c0_35 = arith.constant 0 : index
    %66 = vector.load %arg3[%c3_33, %c0_34, %c0_35] : memref<16x8x8xbf16, #tpu.memory_space<vmem>>, vector<1x8x8xbf16>
    %67 = vector.shape_cast %66 : vector<1x8x8xbf16> to vector<8x8xbf16>
    %cst_36 = arith.constant dense<0.000000e+00> : vector<8x256xf32>
    %68 = tpu.matmul %67, %26, %cst_36 {dimension_numbers = #tpu.dot_dimension_numbers<[1], [0], [0], [1], [0, 0, 1, 1], [], []>} : vector<8x8xbf16>, vector<8x256xbf16>, vector<8x256xf32> -> vector<8x256xf32>
    %69 = arith.addf %65, %68 : vector<8x256xf32>
    %c0_37 = arith.constant 0 : index
    %c0_38 = arith.constant 0 : index
    %c0_39 = arith.constant 0 : index
    %c0_40 = arith.constant 0 : index
    %70 = vector.load %arg4[%c0_37, %c0_38, %c0_39, %c0_40] : memref<1x4x8x256xf32, #tpu.memory_space<vmem>>, vector<1x1x8x256xf32>
    %71 = vector.shape_cast %70 : vector<1x1x8x256xf32> to vector<8x256xf32>
    %72 = vector.shape_cast %69 : vector<8x256xf32> to vector<1x1x8x256xf32>
    tpu.vector_store %arg4[%c0_37, %c0_38, %c0_39, %c0_40], %72 {strides = array<i32>} : memref<1x4x8x256xf32, #tpu.memory_space<vmem>>, vector<1x1x8x256xf32>,
    %cst_41 = arith.constant dense<0.000000e+00> : vector<8xf32>
    %73 = vector.multi_reduction <add>, %69, %cst_41 [1] : vector<8x256xf32> to vector<8xf32>
    %74 = vector.shape_cast %73 : vector<8xf32> to vector<8x1xf32>
    %75 = arith.addf %51, %74 : vector<8x1xf32>
    %76 = arith.mulf %69, %69 : vector<8x256xf32>
    %cst_42 = arith.constant dense<0.000000e+00> : vector<8xf32>
    %77 = vector.multi_reduction <add>, %76, %cst_42 [1] : vector<8x256xf32> to vector<8xf32>
    %78 = vector.shape_cast %77 : vector<8xf32> to vector<8x1xf32>
    %79 = arith.addf %52, %78 : vector<8x1xf32>
    %cst_43 = arith.constant 0.000000e+00 : f32
    %80 = vector.broadcast %cst_43 : f32 to vector<8x256xf32>
    %c4 = arith.constant 4 : index
    %c0_44 = arith.constant 0 : index
    %c0_45 = arith.constant 0 : index
    %81 = vector.load %arg3[%c4, %c0_44, %c0_45] : memref<16x8x8xbf16, #tpu.memory_space<vmem>>, vector<1x8x8xbf16>
    %82 = vector.shape_cast %81 : vector<1x8x8xbf16> to vector<8x8xbf16>
    %cst_46 = arith.constant dense<0.000000e+00> : vector<8x256xf32>
    %83 = tpu.matmul %82, %13, %cst_46 {dimension_numbers = #tpu.dot_dimension_numbers<[1], [0], [0], [1], [0, 0, 1, 1], [], []>} : vector<8x8xbf16>, vector<8x256xbf16>, vector<8x256xf32> -> vector<8x256xf32>
    %84 = arith.addf %80, %83 : vector<8x256xf32>
    %c5_47 = arith.constant 5 : index
    %c0_48 = arith.constant 0 : index
    %c0_49 = arith.constant 0 : index
    %85 = vector.load %arg3[%c5_47, %c0_48, %c0_49] : memref<16x8x8xbf16, #tpu.memory_space<vmem>>, vector<1x8x8xbf16>
    %86 = vector.shape_cast %85 : vector<1x8x8xbf16> to vector<8x8xbf16>
    %cst_50 = arith.constant dense<0.000000e+00> : vector<8x256xf32>
    %87 = tpu.matmul %86, %19, %cst_50 {dimension_numbers = #tpu.dot_dimension_numbers<[1], [0], [0], [1], [0, 0, 1, 1], [], []>} : vector<8x8xbf16>, vector<8x256xbf16>, vector<8x256xf32> -> vector<8x256xf32>
    %88 = arith.addf %84, %87 : vector<8x256xf32>
    %c6_51 = arith.constant 6 : index
    %c0_52 = arith.constant 0 : index
    %c0_53 = arith.constant 0 : index
    %89 = vector.load %arg3[%c6_51, %c0_52, %c0_53] : memref<16x8x8xbf16, #tpu.memory_space<vmem>>, vector<1x8x8xbf16>
    %90 = vector.shape_cast %89 : vector<1x8x8xbf16> to vector<8x8xbf16>
    %cst_54 = arith.constant dense<0.000000e+00> : vector<8x256xf32>
    %91 = tpu.matmul %90, %26, %cst_54 {dimension_numbers = #tpu.dot_dimension_numbers<[1], [0], [0], [1], [0, 0, 1, 1], [], []>} : vector<8x8xbf16>, vector<8x256xbf16>, vector<8x256xf32> -> vector<8x256xf32>
    %92 = arith.addf %88, %91 : vector<8x256xf32>
    %c7_55 = arith.constant 7 : index
    %c0_56 = arith.constant 0 : index
    %c0_57 = arith.constant 0 : index
    %93 = vector.load %arg3[%c7_55, %c0_56, %c0_57] : memref<16x8x8xbf16, #tpu.memory_space<vmem>>, vector<1x8x8xbf16>
    %94 = vector.shape_cast %93 : vector<1x8x8xbf16> to vector<8x8xbf16>
    %cst_58 = arith.constant dense<0.000000e+00> : vector<8x256xf32>
    %95 = tpu.matmul %94, %32, %cst_58 {dimension_numbers = #tpu.dot_dimension_numbers<[1], [0], [0], [1], [0, 0, 1, 1], [], []>} : vector<8x8xbf16>, vector<8x256xbf16>, vector<8x256xf32> -> vector<8x256xf32>
    %96 = arith.addf %92, %95 : vector<8x256xf32>
    %c0_59 = arith.constant 0 : index
    %c1_60 = arith.constant 1 : index
    %c0_61 = arith.constant 0 : index
    %c0_62 = arith.constant 0 : index
    %97 = vector.load %arg4[%c0_59, %c1_60, %c0_61, %c0_62] : memref<1x4x8x256xf32, #tpu.memory_space<vmem>>, vector<1x1x8x256xf32>
    %98 = vector.shape_cast %97 : vector<1x1x8x256xf32> to vector<8x256xf32>
    %99 = vector.shape_cast %96 : vector<8x256xf32> to vector<1x1x8x256xf32>
    tpu.vector_store %arg4[%c0_59, %c1_60, %c0_61, %c0_62], %99 {strides = array<i32>} : memref<1x4x8x256xf32, #tpu.memory_space<vmem>>, vector<1x1x8x256xf32>,
    %cst_63 = arith.constant dense<0.000000e+00> : vector<8xf32>
    %100 = vector.multi_reduction <add>, %96, %cst_63 [1] : vector<8x256xf32> to vector<8xf32>
    %101 = vector.shape_cast %100 : vector<8xf32> to vector<8x1xf32>
    %102 = arith.addf %75, %101 : vector<8x1xf32>
    %103 = arith.mulf %96, %96 : vector<8x256xf32>
    %cst_64 = arith.constant dense<0.000000e+00> : vector<8xf32>
    %104 = vector.multi_reduction <add>, %103, %cst_64 [1] : vector<8x256xf32> to vector<8xf32>
    %105 = vector.shape_cast %104 : vector<8xf32> to vector<8x1xf32>
    %106 = arith.addf %79, %105 : vector<8x1xf32>
    %cst_65 = arith.constant 0.000000e+00 : f32
    %107 = vector.broadcast %cst_65 : f32 to vector<8x256xf32>
    %c8_66 = arith.constant 8 : index
    %c0_67 = arith.constant 0 : index
    %c0_68 = arith.constant 0 : index
    %108 = vector.load %arg3[%c8_66, %c0_67, %c0_68] : memref<16x8x8xbf16, #tpu.memory_space<vmem>>, vector<1x8x8xbf16>
    %109 = vector.shape_cast %108 : vector<1x8x8xbf16> to vector<8x8xbf16>
    %cst_69 = arith.constant dense<0.000000e+00> : vector<8x256xf32>
    %110 = tpu.matmul %109, %25, %cst_69 {dimension_numbers = #tpu.dot_dimension_numbers<[1], [0], [0], [1], [0, 0, 1, 1], [], []>} : vector<8x8xbf16>, vector<8x256xbf16>, vector<8x256xf32> -> vector<8x256xf32>
    %111 = arith.addf %107, %110 : vector<8x256xf32>
    %c9 = arith.constant 9 : index
    %c0_70 = arith.constant 0 : index
    %c0_71 = arith.constant 0 : index
    %112 = vector.load %arg3[%c9, %c0_70, %c0_71] : memref<16x8x8xbf16, #tpu.memory_space<vmem>>, vector<1x8x8xbf16>
    %113 = vector.shape_cast %112 : vector<1x8x8xbf16> to vector<8x8xbf16>
    %cst_72 = arith.constant dense<0.000000e+00> : vector<8x256xf32>
    %114 = tpu.matmul %113, %26, %cst_72 {dimension_numbers = #tpu.dot_dimension_numbers<[1], [0], [0], [1], [0, 0, 1, 1], [], []>} : vector<8x8xbf16>, vector<8x256xbf16>, vector<8x256xf32> -> vector<8x256xf32>
    %115 = arith.addf %111, %114 : vector<8x256xf32>
    %c10 = arith.constant 10 : index
    %c0_73 = arith.constant 0 : index
    %c0_74 = arith.constant 0 : index
    %116 = vector.load %arg3[%c10, %c0_73, %c0_74] : memref<16x8x8xbf16, #tpu.memory_space<vmem>>, vector<1x8x8xbf16>
    %117 = vector.shape_cast %116 : vector<1x8x8xbf16> to vector<8x8xbf16>
    %cst_75 = arith.constant dense<0.000000e+00> : vector<8x256xf32>
    %118 = tpu.matmul %117, %38, %cst_75 {dimension_numbers = #tpu.dot_dimension_numbers<[1], [0], [0], [1], [0, 0, 1, 1], [], []>} : vector<8x8xbf16>, vector<8x256xbf16>, vector<8x256xf32> -> vector<8x256xf32>
    %119 = arith.addf %115, %118 : vector<8x256xf32>
    %c11 = arith.constant 11 : index
    %c0_76 = arith.constant 0 : index
    %c0_77 = arith.constant 0 : index
    %120 = vector.load %arg3[%c11, %c0_76, %c0_77] : memref<16x8x8xbf16, #tpu.memory_space<vmem>>, vector<1x8x8xbf16>
    %121 = vector.shape_cast %120 : vector<1x8x8xbf16> to vector<8x8xbf16>
    %cst_78 = arith.constant dense<0.000000e+00> : vector<8x256xf32>
    %122 = tpu.matmul %121, %44, %cst_78 {dimension_numbers = #tpu.dot_dimension_numbers<[1], [0], [0], [1], [0, 0, 1, 1], [], []>} : vector<8x8xbf16>, vector<8x256xbf16>, vector<8x256xf32> -> vector<8x256xf32>
    %123 = arith.addf %119, %122 : vector<8x256xf32>
    %c0_79 = arith.constant 0 : index
    %c2_80 = arith.constant 2 : index
    %c0_81 = arith.constant 0 : index
    %c0_82 = arith.constant 0 : index
    %124 = vector.load %arg4[%c0_79, %c2_80, %c0_81, %c0_82] : memref<1x4x8x256xf32, #tpu.memory_space<vmem>>, vector<1x1x8x256xf32>
    %125 = vector.shape_cast %124 : vector<1x1x8x256xf32> to vector<8x256xf32>
    %126 = vector.shape_cast %123 : vector<8x256xf32> to vector<1x1x8x256xf32>
    tpu.vector_store %arg4[%c0_79, %c2_80, %c0_81, %c0_82], %126 {strides = array<i32>} : memref<1x4x8x256xf32, #tpu.memory_space<vmem>>, vector<1x1x8x256xf32>,
    %cst_83 = arith.constant dense<0.000000e+00> : vector<8xf32>
    %127 = vector.multi_reduction <add>, %123, %cst_83 [1] : vector<8x256xf32> to vector<8xf32>
    %128 = vector.shape_cast %127 : vector<8xf32> to vector<8x1xf32>
    %129 = arith.addf %102, %128 : vector<8x1xf32>
    %130 = arith.mulf %123, %123 : vector<8x256xf32>
    %cst_84 = arith.constant dense<0.000000e+00> : vector<8xf32>
    %131 = vector.multi_reduction <add>, %130, %cst_84 [1] : vector<8x256xf32> to vector<8xf32>
    %132 = vector.shape_cast %131 : vector<8xf32> to vector<8x1xf32>
    %133 = arith.addf %106, %132 : vector<8x1xf32>
    %cst_85 = arith.constant 0.000000e+00 : f32
    %134 = vector.broadcast %cst_85 : f32 to vector<8x256xf32>
    %c12 = arith.constant 12 : index
    %c0_86 = arith.constant 0 : index
    %c0_87 = arith.constant 0 : index
    %135 = vector.load %arg3[%c12, %c0_86, %c0_87] : memref<16x8x8xbf16, #tpu.memory_space<vmem>>, vector<1x8x8xbf16>
    %136 = vector.shape_cast %135 : vector<1x8x8xbf16> to vector<8x8xbf16>
    %cst_88 = arith.constant dense<0.000000e+00> : vector<8x256xf32>
    %137 = tpu.matmul %136, %26, %cst_88 {dimension_numbers = #tpu.dot_dimension_numbers<[1], [0], [0], [1], [0, 0, 1, 1], [], []>} : vector<8x8xbf16>, vector<8x256xbf16>, vector<8x256xf32> -> vector<8x256xf32>
    %138 = arith.addf %134, %137 : vector<8x256xf32>
    %c13 = arith.constant 13 : index
    %c0_89 = arith.constant 0 : index
    %c0_90 = arith.constant 0 : index
    %139 = vector.load %arg3[%c13, %c0_89, %c0_90] : memref<16x8x8xbf16, #tpu.memory_space<vmem>>, vector<1x8x8xbf16>
    %140 = vector.shape_cast %139 : vector<1x8x8xbf16> to vector<8x8xbf16>
    %cst_91 = arith.constant dense<0.000000e+00> : vector<8x256xf32>
    %141 = tpu.matmul %140, %32, %cst_91 {dimension_numbers = #tpu.dot_dimension_numbers<[1], [0], [0], [1], [0, 0, 1, 1], [], []>} : vector<8x8xbf16>, vector<8x256xbf16>, vector<8x256xf32> -> vector<8x256xf32>
    %142 = arith.addf %138, %141 : vector<8x256xf32>
    %c14 = arith.constant 14 : index
    %c0_92 = arith.constant 0 : index
    %c0_93 = arith.constant 0 : index
    %143 = vector.load %arg3[%c14, %c0_92, %c0_93] : memref<16x8x8xbf16, #tpu.memory_space<vmem>>, vector<1x8x8xbf16>
    %144 = vector.shape_cast %143 : vector<1x8x8xbf16> to vector<8x8xbf16>
    %cst_94 = arith.constant dense<0.000000e+00> : vector<8x256xf32>
    %145 = tpu.matmul %144, %44, %cst_94 {dimension_numbers = #tpu.dot_dimension_numbers<[1], [0], [0], [1], [0, 0, 1, 1], [], []>} : vector<8x8xbf16>, vector<8x256xbf16>, vector<8x256xf32> -> vector<8x256xf32>
    %146 = arith.addf %142, %145 : vector<8x256xf32>
    %c15 = arith.constant 15 : index
    %c0_95 = arith.constant 0 : index
    %c0_96 = arith.constant 0 : index
    %147 = vector.load %arg3[%c15, %c0_95, %c0_96] : memref<16x8x8xbf16, #tpu.memory_space<vmem>>, vector<1x8x8xbf16>
    %148 = vector.shape_cast %147 : vector<1x8x8xbf16> to vector<8x8xbf16>
    %cst_97 = arith.constant dense<0.000000e+00> : vector<8x256xf32>
    %149 = tpu.matmul %148, %50, %cst_97 {dimension_numbers = #tpu.dot_dimension_numbers<[1], [0], [0], [1], [0, 0, 1, 1], [], []>} : vector<8x8xbf16>, vector<8x256xbf16>, vector<8x256xf32> -> vector<8x256xf32>
    %150 = arith.addf %146, %149 : vector<8x256xf32>
    %c0_98 = arith.constant 0 : index
    %c3_99 = arith.constant 3 : index
    %c0_100 = arith.constant 0 : index
    %c0_101 = arith.constant 0 : index
    %151 = vector.load %arg4[%c0_98, %c3_99, %c0_100, %c0_101] : memref<1x4x8x256xf32, #tpu.memory_space<vmem>>, vector<1x1x8x256xf32>
    %152 = vector.shape_cast %151 : vector<1x1x8x256xf32> to vector<8x256xf32>
    %153 = vector.shape_cast %150 : vector<8x256xf32> to vector<1x1x8x256xf32>
    tpu.vector_store %arg4[%c0_98, %c3_99, %c0_100, %c0_101], %153 {strides = array<i32>} : memref<1x4x8x256xf32, #tpu.memory_space<vmem>>, vector<1x1x8x256xf32>,
    %cst_102 = arith.constant dense<0.000000e+00> : vector<8xf32>
    %154 = vector.multi_reduction <add>, %150, %cst_102 [1] : vector<8x256xf32> to vector<8xf32>
    %155 = vector.shape_cast %154 : vector<8xf32> to vector<8x1xf32>
    %156 = arith.addf %129, %155 : vector<8x1xf32>
    %157 = arith.mulf %150, %150 : vector<8x256xf32>
    %cst_103 = arith.constant dense<0.000000e+00> : vector<8xf32>
    %158 = vector.multi_reduction <add>, %157, %cst_103 [1] : vector<8x256xf32> to vector<8xf32>
    %159 = vector.shape_cast %158 : vector<8xf32> to vector<8x1xf32>
    %160 = arith.addf %133, %159 : vector<8x1xf32>
    %cst_104 = arith.constant 9.765625E-4 : f32
    %161 = vector.broadcast %cst_104 : f32 to vector<8x1xf32>
    %162 = arith.mulf %156, %161 : vector<8x1xf32>
    %cst_105 = arith.constant 9.765625E-4 : f32
    %163 = vector.broadcast %cst_105 : f32 to vector<8x1xf32>
    %164 = arith.mulf %160, %163 : vector<8x1xf32>
    %165 = arith.mulf %162, %162 : vector<8x1xf32>
    %166 = arith.subf %164, %165 : vector<8x1xf32>
    %cst_106 = arith.constant 9.99999974E-6 : f32
    %167 = vector.broadcast %cst_106 : f32 to vector<8x1xf32>
    %168 = arith.addf %166, %167 : vector<8x1xf32>
    %169 = math.rsqrt %168 : vector<8x1xf32>
    %c0_107 = arith.constant 0 : index
    %c0_108 = arith.constant 0 : index
    %c0_109 = arith.constant 0 : index
    %c0_110 = arith.constant 0 : index
    %170 = vector.load %arg4[%c0_107, %c0_108, %c0_109, %c0_110] : memref<1x4x8x256xf32, #tpu.memory_space<vmem>>, vector<1x1x8x256xf32>
    %171 = vector.shape_cast %170 : vector<1x1x8x256xf32> to vector<8x256xf32>
    %172 = vector.broadcast %162 : vector<8x1xf32> to vector<8x256xf32>
    %173 = arith.subf %171, %172 : vector<8x256xf32>
    %174 = vector.broadcast %169 : vector<8x1xf32> to vector<8x256xf32>
    %175 = arith.mulf %173, %174 : vector<8x256xf32>
    %cst_111 = arith.constant 0.000000e+00 : f32
    %176 = vector.broadcast %cst_111 : f32 to vector<8x256xf32>
    %177 = arith.maximumf %175, %176 : vector<8x256xf32>
    %c0_112 = arith.constant 0 : index
    %c0_113 = arith.constant 0 : index
    %c0_114 = arith.constant 0 : index
    %c0_115 = arith.constant 0 : index
    %178 = vector.load %arg4[%c0_112, %c0_113, %c0_114, %c0_115] : memref<1x4x8x256xf32, #tpu.memory_space<vmem>>, vector<1x1x8x256xf32>
    %179 = vector.shape_cast %178 : vector<1x1x8x256xf32> to vector<8x256xf32>
    %180 = vector.shape_cast %177 : vector<8x256xf32> to vector<1x1x8x256xf32>
    tpu.vector_store %arg4[%c0_112, %c0_113, %c0_114, %c0_115], %180 {strides = array<i32>} : memref<1x4x8x256xf32, #tpu.memory_space<vmem>>, vector<1x1x8x256xf32>,
    %c0_116 = arith.constant 0 : index
    %c1_117 = arith.constant 1 : index
    %c0_118 = arith.constant 0 : index
    %c0_119 = arith.constant 0 : index
    %181 = vector.load %arg4[%c0_116, %c1_117, %c0_118, %c0_119] : memref<1x4x8x256xf32, #tpu.memory_space<vmem>>, vector<1x1x8x256xf32>
    %182 = vector.shape_cast %181 : vector<1x1x8x256xf32> to vector<8x256xf32>
    %183 = vector.broadcast %162 : vector<8x1xf32> to vector<8x256xf32>
    %184 = arith.subf %182, %183 : vector<8x256xf32>
    %185 = vector.broadcast %169 : vector<8x1xf32> to vector<8x256xf32>
    %186 = arith.mulf %184, %185 : vector<8x256xf32>
    %cst_120 = arith.constant 0.000000e+00 : f32
    %187 = vector.broadcast %cst_120 : f32 to vector<8x256xf32>
    %188 = arith.maximumf %186, %187 : vector<8x256xf32>
    %c0_121 = arith.constant 0 : index
    %c1_122 = arith.constant 1 : index
    %c0_123 = arith.constant 0 : index
    %c0_124 = arith.constant 0 : index
    %189 = vector.load %arg4[%c0_121, %c1_122, %c0_123, %c0_124] : memref<1x4x8x256xf32, #tpu.memory_space<vmem>>, vector<1x1x8x256xf32>
    %190 = vector.shape_cast %189 : vector<1x1x8x256xf32> to vector<8x256xf32>
    %191 = vector.shape_cast %188 : vector<8x256xf32> to vector<1x1x8x256xf32>
    tpu.vector_store %arg4[%c0_121, %c1_122, %c0_123, %c0_124], %191 {strides = array<i32>} : memref<1x4x8x256xf32, #tpu.memory_space<vmem>>, vector<1x1x8x256xf32>,
    %c0_125 = arith.constant 0 : index
    %c2_126 = arith.constant 2 : index
    %c0_127 = arith.constant 0 : index
    %c0_128 = arith.constant 0 : index
    %192 = vector.load %arg4[%c0_125, %c2_126, %c0_127, %c0_128] : memref<1x4x8x256xf32, #tpu.memory_space<vmem>>, vector<1x1x8x256xf32>
    %193 = vector.shape_cast %192 : vector<1x1x8x256xf32> to vector<8x256xf32>
    %194 = vector.broadcast %162 : vector<8x1xf32> to vector<8x256xf32>
    %195 = arith.subf %193, %194 : vector<8x256xf32>
    %196 = vector.broadcast %169 : vector<8x1xf32> to vector<8x256xf32>
    %197 = arith.mulf %195, %196 : vector<8x256xf32>
    %cst_129 = arith.constant 0.000000e+00 : f32
    %198 = vector.broadcast %cst_129 : f32 to vector<8x256xf32>
    %199 = arith.maximumf %197, %198 : vector<8x256xf32>
    %c0_130 = arith.constant 0 : index
    %c2_131 = arith.constant 2 : index
    %c0_132 = arith.constant 0 : index
    %c0_133 = arith.constant 0 : index
    %200 = vector.load %arg4[%c0_130, %c2_131, %c0_132, %c0_133] : memref<1x4x8x256xf32, #tpu.memory_space<vmem>>, vector<1x1x8x256xf32>
    %201 = vector.shape_cast %200 : vector<1x1x8x256xf32> to vector<8x256xf32>
    %202 = vector.shape_cast %199 : vector<8x256xf32> to vector<1x1x8x256xf32>
    tpu.vector_store %arg4[%c0_130, %c2_131, %c0_132, %c0_133], %202 {strides = array<i32>} : memref<1x4x8x256xf32, #tpu.memory_space<vmem>>, vector<1x1x8x256xf32>,
    %c0_134 = arith.constant 0 : index
    %c3_135 = arith.constant 3 : index
    %c0_136 = arith.constant 0 : index
    %c0_137 = arith.constant 0 : index
    %203 = vector.load %arg4[%c0_134, %c3_135, %c0_136, %c0_137] : memref<1x4x8x256xf32, #tpu.memory_space<vmem>>, vector<1x1x8x256xf32>
    %204 = vector.shape_cast %203 : vector<1x1x8x256xf32> to vector<8x256xf32>
    %205 = vector.broadcast %162 : vector<8x1xf32> to vector<8x256xf32>
    %206 = arith.subf %204, %205 : vector<8x256xf32>
    %207 = vector.broadcast %169 : vector<8x1xf32> to vector<8x256xf32>
    %208 = arith.mulf %206, %207 : vector<8x256xf32>
    %cst_138 = arith.constant 0.000000e+00 : f32
    %209 = vector.broadcast %cst_138 : f32 to vector<8x256xf32>
    %210 = arith.maximumf %208, %209 : vector<8x256xf32>
    %c0_139 = arith.constant 0 : index
    %c3_140 = arith.constant 3 : index
    %c0_141 = arith.constant 0 : index
    %c0_142 = arith.constant 0 : index
    %211 = vector.load %arg4[%c0_139, %c3_140, %c0_141, %c0_142] : memref<1x4x8x256xf32, #tpu.memory_space<vmem>>, vector<1x1x8x256xf32>
    %212 = vector.shape_cast %211 : vector<1x1x8x256xf32> to vector<8x256xf32>
    %213 = vector.shape_cast %210 : vector<8x256xf32> to vector<1x1x8x256xf32>
    tpu.vector_store %arg4[%c0_139, %c3_140, %c0_141, %c0_142], %213 {strides = array<i32>} : memref<1x4x8x256xf32, #tpu.memory_space<vmem>>, vector<1x1x8x256xf32>,
    return
  }
  func.func @transform_0(%arg0: i32) -> (i32, i32, i32) {
    %c0_i32 = arith.constant 0 : i32
    %c0_i32_0 = arith.constant 0 : i32
    %c0_i32_1 = arith.constant 0 : i32
    return %arg0, %c0_i32, %c0_i32_0 : i32, i32, i32
  }
  func.func @transform_1(%arg0: i32) -> (i32, i32, i32) {
    %c0_i32 = arith.constant 0 : i32
    %c0_i32_0 = arith.constant 0 : i32
    %c0_i32_1 = arith.constant 0 : i32
    %c0_i32_2 = arith.constant 0 : i32
    return %c0_i32, %c0_i32_0, %c0_i32_1 : i32, i32, i32
  }
  func.func @transform_2(%arg0: i32) -> (i32, i32, i32) {
    %c0_i32 = arith.constant 0 : i32
    %c0_i32_0 = arith.constant 0 : i32
    %c0_i32_1 = arith.constant 0 : i32
    %c0_i32_2 = arith.constant 0 : i32
    return %c0_i32, %c0_i32_0, %c0_i32_1 : i32, i32, i32
  }
  func.func @transform_3(%arg0: i32) -> (i32, i32, i32, i32) {
    %c0_i32 = arith.constant 0 : i32
    %c0_i32_0 = arith.constant 0 : i32
    %c0_i32_1 = arith.constant 0 : i32
    %c0_i32_2 = arith.constant 0 : i32
    return %arg0, %c0_i32, %c0_i32_0, %c0_i32_1 : i32, i32, i32, i32
  }
}

</mosaic_0001>

<llo_original>
// kernel: unet_up.1
$region0: #{unet_up.1}
  #allocation0 [shape = 'u32[]', space=smem, size = 0x4, offset = 0x4, fixed_abs, tag = 'smem constant byte address 0x4 - core index']
  #allocation1 [shape = 'u32[144,128]{1,0:T(1,128)}', space=vmem, size = 0x12000, scoped, tag = 'internal scratch']
  %s0 = inlined_call_operand.vmem [shape: f32[2,8,256], index: 0, kind: input, shape index: {}]
  %s1 = inlined_call_operand.vmem [shape: f32[9,1,256], index: 1, kind: input, shape index: {}]
  %s2 = inlined_call_operand.vmem [shape: bf16[16,8,8], index: 2, kind: input, shape index: {}]
  %s3 = inlined_call_operand.vmem [shape: f32[2,4,8,256], index: 3, kind: output, shape index: {}]
  %s4 = sld [smem:[#allocation0]]
  $region45: #{unet_up.1} parent=0
    _
  %s6 = ssub.s32 1, %s4
  %s7 = scalar_select 0, %s6, %s4
  loop: start=0, step=1, limit=4
  $region2: #{unet_up.1} parent=0 // loop_pre_header
    _
  $region3: #{unet_up.1} parent=0 // loop_header
    %s9 = sphi 0, %s13
    %p10 = scmp.ge.s32.totalorder %s9, 4
    %s19 = sphi 0, %s21
    %s22 = sphi 0, %s19
    %s23 = sphi 0, %s22
    %s39 = sphi 0, %s23
    %s43 = sphi 0, %s43
    %s45 = sphi 0, %s43
    %s46 = sphi 0, %s45
    %s60 = sphi 0, %s46
    %s64 = sphi 0, %s64
    %s66 = sphi 0, %s64
    %s67 = sphi 0, %s66
    %s81 = sphi 0, %s67
    %s87 = sphi 0, %s89
    %s90 = sphi 0, %s87
    %s91 = sphi 0, %s90
    %s107 = sphi 0, %s91
  $region4: #{unet_up.1} parent=0 // loop_header_branch
    %12 = sbr.rel (%p10) target = $region8
  $region5: #{unet_up.1} parent=0 // loop_body
    %s14 = ssub.s32 %s9, 1
    %s15 = ssub.s32 %s9, 2
    %s16 = sadd.s32 %s9, 1
    %s17 = ssub.s32 %s9, %s16
    %p18 = scmp.eq.s32.totalorder %s17, 0
    %s20 = sadd.s32 %s19, 1
    %s21 = scalar_select %p18, %s19, %s20
    %p24 = pneg %p18
    %p25 = scmp.eq.s32.totalorder %s9, 1
    %p26 = por %p24, %p25
    %p27 = scmp.ne.s32.totalorder %s19, %s22
    %p28 = scmp.eq.s32.totalorder %s9, 0
    %p29 = por %p27, %p28
    %p30 = scmp.ne.s32.totalorder %s19, %s22
    %p31 = scmp.eq.s32.totalorder %s14, 1
    %p32 = por %p30, %p31
    %p33 = scmp.ne.s32.totalorder %s22, %s23
    %p34 = scmp.eq.s32.totalorder %s14, 0
    %p35 = por %p33, %p34
    %p36 = scmp.ne.s32.totalorder %s22, %s23
    %p37 = scmp.eq.s32.totalorder %s15, 1
    %p38 = por %p36, %p37
    %p40 = scmp.ne.s32.totalorder %s23, %s39
    %p41 = scmp.eq.s32.totalorder %s15, 0
    %p42 = por %p40, %p41
    %s44 = sadd.s32 %s43, 1
    %p47 = scmp.eq.s32.totalorder %s9, 1
    %p48 = scmp.ne.s32.totalorder %s43, %s45
    %p49 = scmp.eq.s32.totalorder %s9, 0
    %p50 = por %p48, %p49
    %p51 = scmp.ne.s32.totalorder %s43, %s45
    %p52 = scmp.eq.s32.totalorder %s14, 1
    %p53 = por %p51, %p52
    %p54 = scmp.ne.s32.totalorder %s45, %s46
    %p55 = scmp.eq.s32.totalorder %s14, 0
    %p56 = por %p54, %p55
    %p57 = scmp.ne.s32.totalorder %s45, %s46
    %p58 = scmp.eq.s32.totalorder %s15, 1
    %p59 = por %p57, %p58
    %p61 = scmp.ne.s32.totalorder %s46, %s60
    %p62 = scmp.eq.s32.totalorder %s15, 0
    %p63 = por %p61, %p62
    %s65 = sadd.s32 %s64, 1
    %p68 = scmp.eq.s32.totalorder %s9, 1
    %p69 = scmp.ne.s32.totalorder %s64, %s66
    %p70 = scmp.eq.s32.totalorder %s9, 0
    %p71 = por %p69, %p70
    %p72 = scmp.ne.s32.totalorder %s64, %s66
    %p73 = scmp.eq.s32.totalorder %s14, 1
    %p74 = por %p72, %p73
    %p75 = scmp.ne.s32.totalorder %s66, %s67
    %p76 = scmp.eq.s32.totalorder %s14, 0
    %p77 = por %p75, %p76
    %p78 = scmp.ne.s32.totalorder %s66, %s67
    %p79 = scmp.eq.s32.totalorder %s15, 1
    %p80 = por %p78, %p79
    %p82 = scmp.ne.s32.totalorder %s67, %s81
    %p83 = scmp.eq.s32.totalorder %s15, 0
    %p84 = por %p82, %p83
    %s85 = ssub.s32 %s9, %s16
    %p86 = scmp.eq.s32.totalorder %s85, 0
    %s88 = sadd.s32 %s87, 1
    %s89 = scalar_select %p86, %s87, %s88
    %p92 = pneg %p86
    %p93 = scmp.eq.s32.totalorder %s9, 1
    %p94 = por %p92, %p93
    %p95 = scmp.ne.s32.totalorder %s87, %s90
    %p96 = scmp.eq.s32.totalorder %s9, 0
    %p97 = por %p95, %p96
    %p98 = scmp.ne.s32.totalorder %s87, %s90
    %p99 = scmp.eq.s32.totalorder %s14, 1
    %p100 = por %p98, %p99
    %p101 = scmp.ne.s32.totalorder %s90, %s91
    %p102 = scmp.eq.s32.totalorder %s14, 0
    %p103 = por %p101, %p102
    %p104 = scmp.ne.s32.totalorder %s90, %s91
    %p105 = scmp.eq.s32.totalorder %s15, 1
    %p106 = por %p104, %p105
    %p108 = scmp.ne.s32.totalorder %s91, %s107
    %p109 = scmp.eq.s32.totalorder %s15, 0
    %p110 = por %p108, %p109
    %p111 = scmp.le.s32.totalorder 1, %s9
    %p112 = scmp.lt.s32.totalorder %s9, 3
    %p113 = pnand %p111, %p112
    %p114 = pneg %p113
    // Predicated region
    $region9: #{unet_up.1} parent=5 // pred_check
      _
    $region10: #{unet_up.1} parent=5 // pred_check_branch
      %116 = sbr.rel (%p113) target = $region12
    $region11: #{unet_up.1} parent=5 // pred_region
      %s117 = ssub.s32 %s9, 1
      // Predicated region
      $region13: #{unet_up.1} parent=11 // pred_check
        %p118 = pneg %p56
      $region14: #{unet_up.1} parent=11 // pred_check_branch
        %120 = sbr.rel (%p118) target = $region16
      $region15: #{unet_up.1} parent=11 // pred_region
        _
      $region16: #{unet_up.1} parent=11 // pred_fallthru
        _
      // Predicated region
      $region17: #{unet_up.1} parent=11 // pred_check
        %p121 = pneg %p77
      $region18: #{unet_up.1} parent=11 // pred_check_branch
        %123 = sbr.rel (%p121) target = $region20
      $region19: #{unet_up.1} parent=11 // pred_region
        _
      $region20: #{unet_up.1} parent=11 // pred_fallthru
        _
    $region12: #{unet_up.1} parent=5 // pred_fallthru
      _
    %p124 = scmp.lt.s32.totalorder %s9, 2
    // Predicated region
    $region21: #{unet_up.1} parent=5 // pred_check
      %p125 = pneg %p124
    $region22: #{unet_up.1} parent=5 // pred_check_branch
      %127 = sbr.rel (%p125) target = $region24
    $region23: #{unet_up.1} parent=5 // pred_region
      // Predicated region
      $region25: #{unet_up.1} parent=23 // pred_check
        %p128 = pneg %p29
      $region26: #{unet_up.1} parent=23 // pred_check_branch
        %130 = sbr.rel (%p128) target = $region28
      $region27: #{unet_up.1} parent=23 // pred_region
        %p131 = scmp.lt.s32.totalorder %s9, 1
        %s132 = scalar_select %p131, %s9, 1
        %s133 = smul.addr %s132, 2
        %s134 = smul.addr %s133, 8
        %s135 = scalar_lea.vmem %s0, %s134
      $region28: #{unet_up.1} parent=23 // pred_fallthru
        _
    $region24: #{unet_up.1} parent=5 // pred_fallthru
      _
    %p136 = scmp.le.s32.totalorder 1, %s9
    %p137 = scmp.lt.s32.totalorder %s9, 3
    %p138 = pnand %p136, %p137
    %p139 = pneg %p138
    // Predicated region
    $region29: #{unet_up.1} parent=5 // pred_check
      _
    $region30: #{unet_up.1} parent=5 // pred_check_branch
      %141 = sbr.rel (%p138) target = $region32
    $region31: #{unet_up.1} parent=5 // pred_region
      %s142 = ssub.s32 %s9, 1
      %p143 = scmp.lt.s32.totalorder %s14, 1
      %s144 = scalar_select %p143, %s14, 1
      %s145 = smul.addr %s144, 2
      %s146 = smul.addr %s145, 8
      %s147 = scalar_lea.vmem %s0, %s146
      %p148 = pneg %p35
      %p149 = pneg %p32
      %p150 = pneg %p56
      %p151 = pneg %p53
      %p152 = pneg %p77
      %p153 = pneg %p74
      %p154 = pneg %p103
      %p155 = pneg %p100
      %p156 = scmp.lt.s32.totalorder %s14, 1
      %s157 = scalar_select %p156, %s14, 1
      %s158 = smul.addr %s157, 8
      %s159 = smul.addr %s158, 8
      %s160 = scalar_lea.vmem %s3, %s159
      %p161 = scmp.lt.s32.totalorder %s14, 1
      %s162 = scalar_select %p161, %s14, 1
      %s163 = smul.addr %s162, 2
      %s164 = smul.addr %s163, 8
      %s165 = scalar_lea.vmem %s0, %s164
      %p166 = scmp.lt.s32.totalorder %s14, 1
      %s167 = scalar_select %p166, %s14, 1
      %s168 = smul.addr %s167, 8
      %s169 = smul.addr %s168, 8
      %s170 = scalar_lea.vmem %s3, %s169
      %v172 = vld [vmem:[%s165] sm:$0xff]
      %v173 = vld [vmem:[%s165 + $0x8] sm:$0xff]
      %174 = vrot.lane.b32.xlu0 %v172, 17
      %v175 = vpop.permute.xlu0 %174
      %176 = vrot.lane.b32.xlu0 %v173, 17
      %v177 = vpop.permute.xlu0 %176
      %v178 = vlaneseq
      %v179 = vand.u32 %v178, 127
      %vm180 = vcmp.lt.s32.totalorder %v179, 17
      %v181 = vsel %vm180, %v175, %v177
      %v182 = vsel %vm180, %v177, %v175
      %v183 = vld [vmem:[%s1] sm:$0x3]
      %v185 = vlaneseq
      %v186 = vshrl.u32 %v185, 7
      %v187 = vsub.s32 0, %v186
      %v188 = vrot.slane %v183, %v187
      %v189 = vlaneseq
      %v190 = vshrl.u32 %v189, 7
      %v191 = vsub.s32 1, %v190
      %v192 = vrot.slane %v183, %v191
      %v195 = vmul.f32 %v182, %v188
      %v196 = vmul.f32 %v181, %v192
      %v197 = vpack.c.bf16 %v195, %v195
      %v198 = vpack.c.bf16 %v196, %v196
      %199 = vrot.lane.b32.xlu0 %v172, 16
      %v200 = vpop.permute.xlu0 %199
      %201 = vrot.lane.b32.xlu0 %v173, 16
      %v202 = vpop.permute.xlu0 %201
      %vm203 = vcmp.lt.s32.totalorder %v179, 16
      %v204 = vsel %vm203, %v200, %v202
      %v205 = vsel %vm203, %v202, %v200
      %s206 = scalar_lea.vmem %s1, 2
      %v207 = vld [vmem:[%s206] sm:$0x3]
      %v209 = vlaneseq
      %v210 = vshrl.u32 %v209, 7
      %v211 = vsub.s32 0, %v210
      %v212 = vrot.slane %v207, %v211
      %v213 = vlaneseq
      %v214 = vshrl.u32 %v213, 7
      %v215 = vsub.s32 1, %v214
      %v216 = vrot.slane %v207, %v215
      %v219 = vmul.f32 %v205, %v212
      %v220 = vmul.f32 %v204, %v216
      %v221 = vpack.c.bf16 %v219, %v219
      %v222 = vpack.c.bf16 %v220, %v220
      %223 = vrot.lane.b32.xlu0 %v172, 15
      %v224 = vpop.permute.xlu0 %223
      %225 = vrot.lane.b32.xlu0 %v173, 15
      %v226 = vpop.permute.xlu0 %225
      %vm227 = vcmp.lt.s32.totalorder %v179, 15
      %v228 = vsel %vm227, %v224, %v226
      %v229 = vsel %vm227, %v226, %v224
      %s230 = scalar_lea.vmem %s1, 4
      %v231 = vld [vmem:[%s230] sm:$0x3]
      %v233 = vlaneseq
      %v234 = vshrl.u32 %v233, 7
      %v235 = vsub.s32 0, %v234
      %v236 = vrot.slane %v231, %v235
      %v237 = vlaneseq
      %v238 = vshrl.u32 %v237, 7
      %v239 = vsub.s32 1, %v238
      %v240 = vrot.slane %v231, %v239
      %v243 = vmul.f32 %v229, %v236
      %v244 = vmul.f32 %v228, %v240
      %v245 = vpack.c.bf16 %v243, %v243
      %v246 = vpack.c.bf16 %v244, %v244
      %247 = vrot.lane.b32.xlu0 %v172, 1
      %v248 = vpop.permute.xlu0 %247
      %249 = vrot.lane.b32.xlu0 %v173, 1
      %v250 = vpop.permute.xlu0 %249
      %vm251 = vcmp.lt.s32.totalorder %v179, 1
      %v252 = vsel %vm251, %v248, %v250
      %v253 = vsel %vm251, %v250, %v248
      %s254 = scalar_lea.vmem %s1, 6
      %v255 = vld [vmem:[%s254] sm:$0x3]
      %v257 = vlaneseq
      %v258 = vshrl.u32 %v257, 7
      %v259 = vsub.s32 0, %v258
      %v260 = vrot.slane %v255, %v259
      %v261 = vlaneseq
      %v262 = vshrl.u32 %v261, 7
      %v263 = vsub.s32 1, %v262
      %v264 = vrot.slane %v255, %v263
      %v267 = vmul.f32 %v253, %v260
      %v268 = vmul.f32 %v252, %v264
      %v269 = vpack.c.bf16 %v267, %v267
      %v270 = vpack.c.bf16 %v268, %v268
      %v271 = vpack.c.bf16 %v172, %v172
      %v272 = vpack.c.bf16 %v173, %v173
      %273 = vrot.lane.b32.xlu0 %v172, 127
      %v274 = vpop.permute.xlu0 %273
      %275 = vrot.lane.b32.xlu0 %v173, 127
      %v276 = vpop.permute.xlu0 %275
      %vm277 = vcmp.lt.s32.totalorder %v179, 127
      %v278 = vsel %vm277, %v274, %v276
      %v279 = vsel %vm277, %v276, %v274
      %s280 = scalar_lea.vmem %s1, 10
      %v281 = vld [vmem:[%s280] sm:$0x3]
      %v283 = vlaneseq
      %v284 = vshrl.u32 %v283, 7
      %v285 = vsub.s32 0, %v284
      %v286 = vrot.slane %v281, %v285
      %v287 = vlaneseq
      %v288 = vshrl.u32 %v287, 7
      %v289 = vsub.s32 1, %v288
      %v290 = vrot.slane %v281, %v289
      %v293 = vmul.f32 %v278, %v286
      %v294 = vmul.f32 %v279, %v290
      %v295 = vpack.c.bf16 %v293, %v293
      %v296 = vpack.c.bf16 %v294, %v294
      %297 = vrot.lane.b32.xlu0 %v172, 113
      %v298 = vpop.permute.xlu0 %297
      %299 = vrot.lane.b32.xlu0 %v173, 113
      %v300 = vpop.permute.xlu0 %299
      %vm301 = vcmp.lt.s32.totalorder %v179, 113
      %v302 = vsel %vm301, %v298, %v300
      %v303 = vsel %vm301, %v300, %v298
      %s304 = scalar_lea.vmem %s1, 12
      %v305 = vld [vmem:[%s304] sm:$0x3]
      %v307 = vlaneseq
      %v308 = vshrl.u32 %v307, 7
      %v309 = vsub.s32 0, %v308
      %v310 = vrot.slane %v305, %v309
      %v311 = vlaneseq
      %v312 = vshrl.u32 %v311, 7
      %v313 = vsub.s32 1, %v312
      %v314 = vrot.slane %v305, %v313
      %v317 = vmul.f32 %v302, %v310
      %v318 = vmul.f32 %v303, %v314
      %v319 = vpack.c.bf16 %v317, %v317
      %v320 = vpack.c.bf16 %v318, %v318
      %321 = vrot.lane.b32.xlu0 %v172, 112
      %v322 = vpop.permute.xlu0 %321
      %323 = vrot.lane.b32.xlu0 %v173, 112
      %v324 = vpop.permute.xlu0 %323
      %vm325 = vcmp.lt.s32.totalorder %v179, 112
      %v326 = vsel %vm325, %v322, %v324
      %v327 = vsel %vm325, %v324, %v322
      %s328 = scalar_lea.vmem %s1, 14
      %v329 = vld [vmem:[%s328] sm:$0x3]
      %v331 = vlaneseq
      %v332 = vshrl.u32 %v331, 7
      %v333 = vsub.s32 0, %v332
      %v334 = vrot.slane %v329, %v333
      %v335 = vlaneseq
      %v336 = vshrl.u32 %v335, 7
      %v337 = vsub.s32 1, %v336
      %v338 = vrot.slane %v329, %v337
      %v341 = vmul.f32 %v326, %v334
      %v342 = vmul.f32 %v327, %v338
      %v343 = vpack.c.bf16 %v341, %v341
      %v344 = vpack.c.bf16 %v342, %v342
      %345 = vrot.lane.b32.xlu0 %v172, 111
      %v346 = vpop.permute.xlu0 %345
      %347 = vrot.lane.b32.xlu0 %v173, 111
      %v348 = vpop.permute.xlu0 %347
      %vm349 = vcmp.lt.s32.totalorder %v179, 111
      %v350 = vsel %vm349, %v346, %v348
      %v351 = vsel %vm349, %v348, %v346
      %s352 = scalar_lea.vmem %s1, 16
      %v353 = vld [vmem:[%s352] sm:$0x3]
      %v355 = vlaneseq
      %v356 = vshrl.u32 %v355, 7
      %v357 = vsub.s32 0, %v356
      %v358 = vrot.slane %v353, %v357
      %v359 = vlaneseq
      %v360 = vshrl.u32 %v359, 7
      %v361 = vsub.s32 1, %v360
      %v362 = vrot.slane %v353, %v361
      %v365 = vmul.f32 %v350, %v358
      %v366 = vmul.f32 %v351, %v362
      %v367 = vpack.c.bf16 %v365, %v365
      %v368 = vpack.c.bf16 %v366, %v366
      %v369 = vld [vmem:[%s2] sm:$0xf]
      %s370 = scalar_lea.vmem %s2, 4
      %v371 = vld [vmem:[%s370] sm:$0xf]
      %vm372 = vcmask 64512
      %v374 = vsel %vm372, %v371, 0
      %vm376 = vcmask 1043456
      %v378 = vsel %vm376, %v221, 0
      %v381 = vsel %vm376, %v222, 0
      %383 = vmatprep.subr.bf16.mxu0 0
      %384 = vmatpush1.bf16.msra.mxu0 0
      %385 = vmatprep.subr.bf16.mxu0 0
      %386 = vmatpush1.bf16.msra.mxu0 0
      %387 = vmatprep.subr.bf16.mxu0 0
      %388 = vmatpush1.bf16.msra.mxu0 0
      %389 = vmatprep.subr.bf16.mxu0 0
      %390 = vmatpush1.bf16.msra.mxu0 0
      %391 = vmatprep.subr.bf16.mxu0 0
      %392 = vmatpush1.bf16.msra.mxu0 0
      %393 = vmatprep.subr.bf16.mxu0 0
      %394 = vmatpush1.bf16.msra.mxu0 0
      %395 = vmatprep.subr.bf16.mxu0 0
      %396 = vmatpush1.bf16.msra.mxu0 0
      %397 = vmatprep.subr.bf16.mxu0 %v381
      %398 = vmatpush1.bf16.msra.mxu0 %v378
      %399 = vmatprep.subr.bf16.mxu0 0
      %400 = vmatpush2.bf16.msra.mxu0 0
      %401 = vmatprep.subr.bf16.mxu0 0
      %402 = vmatpush2.bf16.msra.mxu0 0
      %403 = vmatprep.subr.bf16.mxu0 0
      %404 = vmatpush2.bf16.msra.mxu0 0
      %405 = vmatprep.subr.bf16.mxu0 0
      %406 = vmatpush2.bf16.msra.mxu0 0
      %407 = vmatprep.subr.bf16.mxu0 0
      %408 = vmatpush2.bf16.msra.mxu0 0
      %409 = vmatprep.subr.bf16.mxu0 0
      %410 = vmatpush2.bf16.msra.mxu0 0
      %411 = vmatprep.subr.bf16.mxu0 0
      %412 = vmatpush2.bf16.msra.mxu0 0
      %413 = vmatprep.subr.bf16.mxu0 0
      %414 = vmatpush2.bf16.msra.mxu0 0
      %415 = vmatprep.mubr.bf16.mxu0 0
      %416 = vmatmul.mubr.bf16.gmra.mxu0 %v374
      %v417 = vpop.f32.mrf.mxu0
      %v418 = vadd.f32 0.0, %v417
      %v419 = vpop.f32.mrf.mxu0
      %v420 = vadd.f32 0.0, %v419
      %v421 = vpop.f32.mrf.mxu0
      %v422 = vpop.f32.mrf.mxu0
      %423 = vdwg.mxu0
      %v425 = vsel %vm372, %v369, 0
      %v428 = vsel %vm376, %v197, 0
      %v431 = vsel %vm376, %v198, 0
      %433 = vmatprep.subr.bf16.mxu0 0
      %434 = vmatpush1.bf16.msra.mxu0 0
      %435 = vmatprep.subr.bf16.mxu0 0
      %436 = vmatpush1.bf16.msra.mxu0 0
      %437 = vmatprep.subr.bf16.mxu0 0
      %438 = vmatpush1.bf16.msra.mxu0 0
      %439 = vmatprep.subr.bf16.mxu0 0
      %440 = vmatpush1.bf16.msra.mxu0 0
      %441 = vmatprep.subr.bf16.mxu0 0
      %442 = vmatpush1.bf16.msra.mxu0 0
      %443 = vmatprep.subr.bf16.mxu0 0
      %444 = vmatpush1.bf16.msra.mxu0 0
      %445 = vmatprep.subr.bf16.mxu0 0
      %446 = vmatpush1.bf16.msra.mxu0 0
      %447 = vmatprep.subr.bf16.mxu0 %v431
      %448 = vmatpush1.bf16.msra.mxu0 %v428
      %449 = vmatprep.subr.bf16.mxu0 0
      %450 = vmatpush2.bf16.msra.mxu0 0
      %451 = vmatprep.subr.bf16.mxu0 0
      %452 = vmatpush2.bf16.msra.mxu0 0
      %453 = vmatprep.subr.bf16.mxu0 0
      %454 = vmatpush2.bf16.msra.mxu0 0
      %455 = vmatprep.subr.bf16.mxu0 0
      %456 = vmatpush2.bf16.msra.mxu0 0
      %457 = vmatprep.subr.bf16.mxu0 0
      %458 = vmatpush2.bf16.msra.mxu0 0
      %459 = vmatprep.subr.bf16.mxu0 0
      %460 = vmatpush2.bf16.msra.mxu0 0
      %461 = vmatprep.subr.bf16.mxu0 0
      %462 = vmatpush2.bf16.msra.mxu0 0
      %463 = vmatprep.subr.bf16.mxu0 0
      %464 = vmatpush2.bf16.msra.mxu0 0
      %465 = vmatprep.mubr.bf16.mxu0 0
      %466 = vmatmul.mubr.bf16.gmra.mxu0 %v425
      %v467 = vpop.f32.mrf.mxu0
      %v468 = vadd.f32 %v418, %v467
      %v469 = vpop.f32.mrf.mxu0
      %v470 = vadd.f32 %v420, %v469
      %v471 = vpop.f32.mrf.mxu0
      %v472 = vpop.f32.mrf.mxu0
      %473 = vdwg.mxu0
      %s474 = scalar_lea.vmem %s2, 8
      %v475 = vld [vmem:[%s474] sm:$0xf]
      %v477 = vsel %vm372, %v475, 0
      %v480 = vsel %vm376, %v269, 0
      %v483 = vsel %vm376, %v270, 0
      %485 = vmatprep.subr.bf16.mxu0 0
      %486 = vmatpush1.bf16.msra.mxu0 0
      %487 = vmatprep.subr.bf16.mxu0 0
      %488 = vmatpush1.bf16.msra.mxu0 0
      %489 = vmatprep.subr.bf16.mxu0 0
      %490 = vmatpush1.bf16.msra.mxu0 0
      %491 = vmatprep.subr.bf16.mxu0 0
      %492 = vmatpush1.bf16.msra.mxu0 0
      %493 = vmatprep.subr.bf16.mxu0 0
      %494 = vmatpush1.bf16.msra.mxu0 0
      %495 = vmatprep.subr.bf16.mxu0 0
      %496 = vmatpush1.bf16.msra.mxu0 0
      %497 = vmatprep.subr.bf16.mxu0 0
      %498 = vmatpush1.bf16.msra.mxu0 0
      %499 = vmatprep.subr.bf16.mxu0 %v483
      %500 = vmatpush1.bf16.msra.mxu0 %v480
      %501 = vmatprep.subr.bf16.mxu0 0
      %502 = vmatpush2.bf16.msra.mxu0 0
      %503 = vmatprep.subr.bf16.mxu0 0
      %504 = vmatpush2.bf16.msra.mxu0 0
      %505 = vmatprep.subr.bf16.mxu0 0
      %506 = vmatpush2.bf16.msra.mxu0 0
      %507 = vmatprep.subr.bf16.mxu0 0
      %508 = vmatpush2.bf16.msra.mxu0 0
      %509 = vmatprep.subr.bf16.mxu0 0
      %510 = vmatpush2.bf16.msra.mxu0 0
      %511 = vmatprep.subr.bf16.mxu0 0
      %512 = vmatpush2.bf16.msra.mxu0 0
      %513 = vmatprep.subr.bf16.mxu0 0
      %514 = vmatpush2.bf16.msra.mxu0 0
      %515 = vmatprep.subr.bf16.mxu0 0
      %516 = vmatpush2.bf16.msra.mxu0 0
      %517 = vmatprep.mubr.bf16.mxu0 0
      %518 = vmatmul.mubr.bf16.gmra.mxu0 %v477
      %v519 = vpop.f32.mrf.mxu0
      %v520 = vadd.f32 0.0, %v519
      %v521 = vpop.f32.mrf.mxu0
      %v522 = vadd.f32 0.0, %v521
      %v523 = vpop.f32.mrf.mxu0
      %v524 = vpop.f32.mrf.mxu0
      %525 = vdwg.mxu0
      %v526 = vadd.f32 %v468, %v520
      %v527 = vadd.f32 %v470, %v522
      %s528 = scalar_lea.vmem %s2, 12
      %v529 = vld [vmem:[%s528] sm:$0xf]
      %v531 = vsel %vm372, %v529, 0
      %v534 = vsel %vm376, %v271, 0
      %v537 = vsel %vm376, %v272, 0
      %539 = vmatprep.subr.bf16.mxu0 0
      %540 = vmatpush1.bf16.msra.mxu0 0
      %541 = vmatprep.subr.bf16.mxu0 0
      %542 = vmatpush1.bf16.msra.mxu0 0
      %543 = vmatprep.subr.bf16.mxu0 0
      %544 = vmatpush1.bf16.msra.mxu0 0
      %545 = vmatprep.subr.bf16.mxu0 0
      %546 = vmatpush1.bf16.msra.mxu0 0
      %547 = vmatprep.subr.bf16.mxu0 0
      %548 = vmatpush1.bf16.msra.mxu0 0
      %549 = vmatprep.subr.bf16.mxu0 0
      %550 = vmatpush1.bf16.msra.mxu0 0
      %551 = vmatprep.subr.bf16.mxu0 0
      %552 = vmatpush1.bf16.msra.mxu0 0
      %553 = vmatprep.subr.bf16.mxu0 %v537
      %554 = vmatpush1.bf16.msra.mxu0 %v534
      %555 = vmatprep.subr.bf16.mxu0 0
      %556 = vmatpush2.bf16.msra.mxu0 0
      %557 = vmatprep.subr.bf16.mxu0 0
      %558 = vmatpush2.bf16.msra.mxu0 0
      %559 = vmatprep.subr.bf16.mxu0 0
      %560 = vmatpush2.bf16.msra.mxu0 0
      %561 = vmatprep.subr.bf16.mxu0 0
      %562 = vmatpush2.bf16.msra.mxu0 0
      %563 = vmatprep.subr.bf16.mxu0 0
      %564 = vmatpush2.bf16.msra.mxu0 0
      %565 = vmatprep.subr.bf16.mxu0 0
      %566 = vmatpush2.bf16.msra.mxu0 0
      %567 = vmatprep.subr.bf16.mxu0 0
      %568 = vmatpush2.bf16.msra.mxu0 0
      %569 = vmatprep.subr.bf16.mxu0 0
      %570 = vmatpush2.bf16.msra.mxu0 0
      %571 = vmatprep.mubr.bf16.mxu0 0
      %572 = vmatmul.mubr.bf16.gmra.mxu0 %v531
      %v573 = vpop.f32.mrf.mxu0
      %v574 = vadd.f32 0.0, %v573
      %v575 = vpop.f32.mrf.mxu0
      %v576 = vadd.f32 0.0, %v575
      %v577 = vpop.f32.mrf.mxu0
      %v578 = vpop.f32.mrf.mxu0
      %579 = vdwg.mxu0
      %v580 = vadd.f32 %v526, %v574
      %v581 = vadd.f32 %v527, %v576
      %582 = vst [vmem:[%s170] sm:$0xff] %v580
      %583 = vst [vmem:[%s170 + $0x8] sm:$0xff] %v581
      %v584 = vadd.f32 %v580, %v581
      %585 = vadd.xlane.f32.xlu0 %v584
      %v586 = vpop.xlane.xlu0 %585
      %v587 = vadd.f32 %v586, 0.0
      %v588 = vmul.f32 %v580, %v580
      %v589 = vmul.f32 %v581, %v581
      %v590 = vadd.f32 %v588, %v589
      %591 = vadd.xlane.f32.xlu0 %v590
      %v592 = vpop.xlane.xlu0 %591
      %v593 = vadd.f32 %v592, 0.0
      %s594 = scalar_lea.vmem %s2, 16
      %v595 = vld [vmem:[%s594] sm:$0xf]
      %s596 = scalar_lea.vmem %s2, 20
      %v597 = vld [vmem:[%s596] sm:$0xf]
      %v599 = vsel %vm372, %v597, 0
      %v602 = vsel %vm376, %v245, 0
      %v605 = vsel %vm376, %v246, 0
      %607 = vmatprep.subr.bf16.mxu0 0
      %608 = vmatpush1.bf16.msra.mxu0 0
      %609 = vmatprep.subr.bf16.mxu0 0
      %610 = vmatpush1.bf16.msra.mxu0 0
      %611 = vmatprep.subr.bf16.mxu0 0
      %612 = vmatpush1.bf16.msra.mxu0 0
      %613 = vmatprep.subr.bf16.mxu0 0
      %614 = vmatpush1.bf16.msra.mxu0 0
      %615 = vmatprep.subr.bf16.mxu0 0
      %616 = vmatpush1.bf16.msra.mxu0 0
      %617 = vmatprep.subr.bf16.mxu0 0
      %618 = vmatpush1.bf16.msra.mxu0 0
      %619 = vmatprep.subr.bf16.mxu0 0
      %620 = vmatpush1.bf16.msra.mxu0 0
      %621 = vmatprep.subr.bf16.mxu0 %v605
      %622 = vmatpush1.bf16.msra.mxu0 %v602
      %623 = vmatprep.subr.bf16.mxu0 0
      %624 = vmatpush2.bf16.msra.mxu0 0
      %625 = vmatprep.subr.bf16.mxu0 0
      %626 = vmatpush2.bf16.msra.mxu0 0
      %627 = vmatprep.subr.bf16.mxu0 0
      %628 = vmatpush2.bf16.msra.mxu0 0
      %629 = vmatprep.subr.bf16.mxu0 0
      %630 = vmatpush2.bf16.msra.mxu0 0
      %631 = vmatprep.subr.bf16.mxu0 0
      %632 = vmatpush2.bf16.msra.mxu0 0
      %633 = vmatprep.subr.bf16.mxu0 0
      %634 = vmatpush2.bf16.msra.mxu0 0
      %635 = vmatprep.subr.bf16.mxu0 0
      %636 = vmatpush2.bf16.msra.mxu0 0
      %637 = vmatprep.subr.bf16.mxu0 0
      %638 = vmatpush2.bf16.msra.mxu0 0
      %639 = vmatprep.mubr.bf16.mxu0 0
      %640 = vmatmul.mubr.bf16.gmra.mxu0 %v599
      %v641 = vpop.f32.mrf.mxu0
      %v642 = vadd.f32 0.0, %v641
      %v643 = vpop.f32.mrf.mxu0
      %v644 = vadd.f32 0.0, %v643
      %v645 = vpop.f32.mrf.mxu0
      %v646 = vpop.f32.mrf.mxu0
      %647 = vdwg.mxu0
      %v649 = vsel %vm372, %v595, 0
      %651 = vmatprep.subr.bf16.mxu0 0
      %652 = vmatpush1.bf16.msra.mxu0 0
      %653 = vmatprep.subr.bf16.mxu0 0
      %654 = vmatpush1.bf16.msra.mxu0 0
      %655 = vmatprep.subr.bf16.mxu0 0
      %656 = vmatpush1.bf16.msra.mxu0 0
      %657 = vmatprep.subr.bf16.mxu0 0
      %658 = vmatpush1.bf16.msra.mxu0 0
      %659 = vmatprep.subr.bf16.mxu0 0
      %660 = vmatpush1.bf16.msra.mxu0 0
      %661 = vmatprep.subr.bf16.mxu0 0
      %662 = vmatpush1.bf16.msra.mxu0 0
      %663 = vmatprep.subr.bf16.mxu0 0
      %664 = vmatpush1.bf16.msra.mxu0 0
      %665 = vmatprep.subr.bf16.mxu0 %v381
      %666 = vmatpush1.bf16.msra.mxu0 %v378
      %667 = vmatprep.subr.bf16.mxu0 0
      %668 = vmatpush2.bf16.msra.mxu0 0
      %669 = vmatprep.subr.bf16.mxu0 0
      %670 = vmatpush2.bf16.msra.mxu0 0
      %671 = vmatprep.subr.bf16.mxu0 0
      %672 = vmatpush2.bf16.msra.mxu0 0
      %673 = vmatprep.subr.bf16.mxu0 0
      %674 = vmatpush2.bf16.msra.mxu0 0
      %675 = vmatprep.subr.bf16.mxu0 0
      %676 = vmatpush2.bf16.msra.mxu0 0
      %677 = vmatprep.subr.bf16.mxu0 0
      %678 = vmatpush2.bf16.msra.mxu0 0
      %679 = vmatprep.subr.bf16.mxu0 0
      %680 = vmatpush2.bf16.msra.mxu0 0
      %681 = vmatprep.subr.bf16.mxu0 0
      %682 = vmatpush2.bf16.msra.mxu0 0
      %683 = vmatprep.mubr.bf16.mxu0 0
      %684 = vmatmul.mubr.bf16.gmra.mxu0 %v649
      %v685 = vpop.f32.mrf.mxu0
      %v686 = vadd.f32 %v642, %v685
      %v687 = vpop.f32.mrf.mxu0
      %v688 = vadd.f32 %v644, %v687
      %v689 = vpop.f32.mrf.mxu0
      %v690 = vpop.f32.mrf.mxu0
      %691 = vdwg.mxu0
      %s692 = scalar_lea.vmem %s2, 24
      %v693 = vld [vmem:[%s692] sm:$0xf]
      %v695 = vsel %vm372, %v693, 0
      %697 = vmatprep.subr.bf16.mxu0 0
      %698 = vmatpush1.bf16.msra.mxu0 0
      %699 = vmatprep.subr.bf16.mxu0 0
      %700 = vmatpush1.bf16.msra.mxu0 0
      %701 = vmatprep.subr.bf16.mxu0 0
      %702 = vmatpush1.bf16.msra.mxu0 0
      %703 = vmatprep.subr.bf16.mxu0 0
      %704 = vmatpush1.bf16.msra.mxu0 0
      %705 = vmatprep.subr.bf16.mxu0 0
      %706 = vmatpush1.bf16.msra.mxu0 0
      %707 = vmatprep.subr.bf16.mxu0 0
      %708 = vmatpush1.bf16.msra.mxu0 0
      %709 = vmatprep.subr.bf16.mxu0 0
      %710 = vmatpush1.bf16.msra.mxu0 0
      %711 = vmatprep.subr.bf16.mxu0 %v537
      %712 = vmatpush1.bf16.msra.mxu0 %v534
      %713 = vmatprep.subr.bf16.mxu0 0
      %714 = vmatpush2.bf16.msra.mxu0 0
      %715 = vmatprep.subr.bf16.mxu0 0
      %716 = vmatpush2.bf16.msra.mxu0 0
      %717 = vmatprep.subr.bf16.mxu0 0
      %718 = vmatpush2.bf16.msra.mxu0 0
      %719 = vmatprep.subr.bf16.mxu0 0
      %720 = vmatpush2.bf16.msra.mxu0 0
      %721 = vmatprep.subr.bf16.mxu0 0
      %722 = vmatpush2.bf16.msra.mxu0 0
      %723 = vmatprep.subr.bf16.mxu0 0
      %724 = vmatpush2.bf16.msra.mxu0 0
      %725 = vmatprep.subr.bf16.mxu0 0
      %726 = vmatpush2.bf16.msra.mxu0 0
      %727 = vmatprep.subr.bf16.mxu0 0
      %728 = vmatpush2.bf16.msra.mxu0 0
      %729 = vmatprep.mubr.bf16.mxu0 0
      %730 = vmatmul.mubr.bf16.gmra.mxu0 %v695
      %v731 = vpop.f32.mrf.mxu0
      %v732 = vadd.f32 0.0, %v731
      %v733 = vpop.f32.mrf.mxu0
      %v734 = vadd.f32 0.0, %v733
      %v735 = vpop.f32.mrf.mxu0
      %v736 = vpop.f32.mrf.mxu0
      %737 = vdwg.mxu0
      %v738 = vadd.f32 %v686, %v732
      %v739 = vadd.f32 %v688, %v734
      %s740 = scalar_lea.vmem %s2, 28
      %v741 = vld [vmem:[%s740] sm:$0xf]
      %v743 = vsel %vm372, %v741, 0
      %v746 = vsel %vm376, %v295, 0
      %v749 = vsel %vm376, %v296, 0
      %751 = vmatprep.subr.bf16.mxu0 0
      %752 = vmatpush1.bf16.msra.mxu0 0
      %753 = vmatprep.subr.bf16.mxu0 0
      %754 = vmatpush1.bf16.msra.mxu0 0
      %755 = vmatprep.subr.bf16.mxu0 0
      %756 = vmatpush1.bf16.msra.mxu0 0
      %757 = vmatprep.subr.bf16.mxu0 0
      %758 = vmatpush1.bf16.msra.mxu0 0
      %759 = vmatprep.subr.bf16.mxu0 0
      %760 = vmatpush1.bf16.msra.mxu0 0
      %761 = vmatprep.subr.bf16.mxu0 0
      %762 = vmatpush1.bf16.msra.mxu0 0
      %763 = vmatprep.subr.bf16.mxu0 0
      %764 = vmatpush1.bf16.msra.mxu0 0
      %765 = vmatprep.subr.bf16.mxu0 %v749
      %766 = vmatpush1.bf16.msra.mxu0 %v746
      %767 = vmatprep.subr.bf16.mxu0 0
      %768 = vmatpush2.bf16.msra.mxu0 0
      %769 = vmatprep.subr.bf16.mxu0 0
      %770 = vmatpush2.bf16.msra.mxu0 0
      %771 = vmatprep.subr.bf16.mxu0 0
      %772 = vmatpush2.bf16.msra.mxu0 0
      %773 = vmatprep.subr.bf16.mxu0 0
      %774 = vmatpush2.bf16.msra.mxu0 0
      %775 = vmatprep.subr.bf16.mxu0 0
      %776 = vmatpush2.bf16.msra.mxu0 0
      %777 = vmatprep.subr.bf16.mxu0 0
      %778 = vmatpush2.bf16.msra.mxu0 0
      %779 = vmatprep.subr.bf16.mxu0 0
      %780 = vmatpush2.bf16.msra.mxu0 0
      %781 = vmatprep.subr.bf16.mxu0 0
      %782 = vmatpush2.bf16.msra.mxu0 0
      %783 = vmatprep.mubr.bf16.mxu0 0
      %784 = vmatmul.mubr.bf16.gmra.mxu0 %v743
      %v785 = vpop.f32.mrf.mxu0
      %v786 = vadd.f32 0.0, %v785
      %v787 = vpop.f32.mrf.mxu0
      %v788 = vadd.f32 0.0, %v787
      %v789 = vpop.f32.mrf.mxu0
      %v790 = vpop.f32.mrf.mxu0
      %791 = vdwg.mxu0
      %v792 = vadd.f32 %v738, %v786
      %v793 = vadd.f32 %v739, %v788
      %s794 = scalar_lea.vmem %s170, 16
      %795 = vst [vmem:[%s794] sm:$0xff] %v792
      %796 = vst [vmem:[%s794 + $0x8] sm:$0xff] %v793
      %v797 = vadd.f32 %v792, %v793
      %798 = vadd.xlane.f32.xlu0 %v797
      %v799 = vpop.xlane.xlu0 %798
      %v800 = vadd.f32 %v587, %v799
      %v801 = vmul.f32 %v792, %v792
      %v802 = vmul.f32 %v793, %v793
      %v803 = vadd.f32 %v801, %v802
      %804 = vadd.xlane.f32.xlu0 %v803
      %v805 = vpop.xlane.xlu0 %804
      %v806 = vadd.f32 %v593, %v805
      %s807 = scalar_lea.vmem %s2, 32
      %v808 = vld [vmem:[%s807] sm:$0xf]
      %s809 = scalar_lea.vmem %s2, 36
      %v810 = vld [vmem:[%s809] sm:$0xf]
      %v812 = vsel %vm372, %v810, 0
      %814 = vmatprep.subr.bf16.mxu0 0
      %815 = vmatpush1.bf16.msra.mxu0 0
      %816 = vmatprep.subr.bf16.mxu0 0
      %817 = vmatpush1.bf16.msra.mxu0 0
      %818 = vmatprep.subr.bf16.mxu0 0
      %819 = vmatpush1.bf16.msra.mxu0 0
      %820 = vmatprep.subr.bf16.mxu0 0
      %821 = vmatpush1.bf16.msra.mxu0 0
      %822 = vmatprep.subr.bf16.mxu0 0
      %823 = vmatpush1.bf16.msra.mxu0 0
      %824 = vmatprep.subr.bf16.mxu0 0
      %825 = vmatpush1.bf16.msra.mxu0 0
      %826 = vmatprep.subr.bf16.mxu0 0
      %827 = vmatpush1.bf16.msra.mxu0 0
      %828 = vmatprep.subr.bf16.mxu0 %v537
      %829 = vmatpush1.bf16.msra.mxu0 %v534
      %830 = vmatprep.subr.bf16.mxu0 0
      %831 = vmatpush2.bf16.msra.mxu0 0
      %832 = vmatprep.subr.bf16.mxu0 0
      %833 = vmatpush2.bf16.msra.mxu0 0
      %834 = vmatprep.subr.bf16.mxu0 0
      %835 = vmatpush2.bf16.msra.mxu0 0
      %836 = vmatprep.subr.bf16.mxu0 0
      %837 = vmatpush2.bf16.msra.mxu0 0
      %838 = vmatprep.subr.bf16.mxu0 0
      %839 = vmatpush2.bf16.msra.mxu0 0
      %840 = vmatprep.subr.bf16.mxu0 0
      %841 = vmatpush2.bf16.msra.mxu0 0
      %842 = vmatprep.subr.bf16.mxu0 0
      %843 = vmatpush2.bf16.msra.mxu0 0
      %844 = vmatprep.subr.bf16.mxu0 0
      %845 = vmatpush2.bf16.msra.mxu0 0
      %846 = vmatprep.mubr.bf16.mxu0 0
      %847 = vmatmul.mubr.bf16.gmra.mxu0 %v812
      %v848 = vpop.f32.mrf.mxu0
      %v849 = vadd.f32 0.0, %v848
      %v850 = vpop.f32.mrf.mxu0
      %v851 = vadd.f32 0.0, %v850
      %v852 = vpop.f32.mrf.mxu0
      %v853 = vpop.f32.mrf.mxu0
      %854 = vdwg.mxu0
      %v856 = vsel %vm372, %v808, 0
      %858 = vmatprep.subr.bf16.mxu0 0
      %859 = vmatpush1.bf16.msra.mxu0 0
      %860 = vmatprep.subr.bf16.mxu0 0
      %861 = vmatpush1.bf16.msra.mxu0 0
      %862 = vmatprep.subr.bf16.mxu0 0
      %863 = vmatpush1.bf16.msra.mxu0 0
      %864 = vmatprep.subr.bf16.mxu0 0
      %865 = vmatpush1.bf16.msra.mxu0 0
      %866 = vmatprep.subr.bf16.mxu0 0
      %867 = vmatpush1.bf16.msra.mxu0 0
      %868 = vmatprep.subr.bf16.mxu0 0
      %869 = vmatpush1.bf16.msra.mxu0 0
      %870 = vmatprep.subr.bf16.mxu0 0
      %871 = vmatpush1.bf16.msra.mxu0 0
      %872 = vmatprep.subr.bf16.mxu0 %v483
      %873 = vmatpush1.bf16.msra.mxu0 %v480
      %874 = vmatprep.subr.bf16.mxu0 0
      %875 = vmatpush2.bf16.msra.mxu0 0
      %876 = vmatprep.subr.bf16.mxu0 0
      %877 = vmatpush2.bf16.msra.mxu0 0
      %878 = vmatprep.subr.bf16.mxu0 0
      %879 = vmatpush2.bf16.msra.mxu0 0
      %880 = vmatprep.subr.bf16.mxu0 0
      %881 = vmatpush2.bf16.msra.mxu0 0
      %882 = vmatprep.subr.bf16.mxu0 0
      %883 = vmatpush2.bf16.msra.mxu0 0
      %884 = vmatprep.subr.bf16.mxu0 0
      %885 = vmatpush2.bf16.msra.mxu0 0
      %886 = vmatprep.subr.bf16.mxu0 0
      %887 = vmatpush2.bf16.msra.mxu0 0
      %888 = vmatprep.subr.bf16.mxu0 0
      %889 = vmatpush2.bf16.msra.mxu0 0
      %890 = vmatprep.mubr.bf16.mxu0 0
      %891 = vmatmul.mubr.bf16.gmra.mxu0 %v856
      %v892 = vpop.f32.mrf.mxu0
      %v893 = vadd.f32 %v849, %v892
      %v894 = vpop.f32.mrf.mxu0
      %v895 = vadd.f32 %v851, %v894
      %v896 = vpop.f32.mrf.mxu0
      %v897 = vpop.f32.mrf.mxu0
      %898 = vdwg.mxu0
      %s899 = scalar_lea.vmem %s2, 40
      %v900 = vld [vmem:[%s899] sm:$0xf]
      %v902 = vsel %vm372, %v900, 0
      %v905 = vsel %vm376, %v319, 0
      %v908 = vsel %vm376, %v320, 0
      %910 = vmatprep.subr.bf16.mxu0 0
      %911 = vmatpush1.bf16.msra.mxu0 0
      %912 = vmatprep.subr.bf16.mxu0 0
      %913 = vmatpush1.bf16.msra.mxu0 0
      %914 = vmatprep.subr.bf16.mxu0 0
      %915 = vmatpush1.bf16.msra.mxu0 0
      %916 = vmatprep.subr.bf16.mxu0 0
      %917 = vmatpush1.bf16.msra.mxu0 0
      %918 = vmatprep.subr.bf16.mxu0 0
      %919 = vmatpush1.bf16.msra.mxu0 0
      %920 = vmatprep.subr.bf16.mxu0 0
      %921 = vmatpush1.bf16.msra.mxu0 0
      %922 = vmatprep.subr.bf16.mxu0 0
      %923 = vmatpush1.bf16.msra.mxu0 0
      %924 = vmatprep.subr.bf16.mxu0 %v908
      %925 = vmatpush1.bf16.msra.mxu0 %v905
      %926 = vmatprep.subr.bf16.mxu0 0
      %927 = vmatpush2.bf16.msra.mxu0 0
      %928 = vmatprep.subr.bf16.mxu0 0
      %929 = vmatpush2.bf16.msra.mxu0 0
      %930 = vmatprep.subr.bf16.mxu0 0
      %931 = vmatpush2.bf16.msra.mxu0 0
      %932 = vmatprep.subr.bf16.mxu0 0
      %933 = vmatpush2.bf16.msra.mxu0 0
      %934 = vmatprep.subr.bf16.mxu0 0
      %935 = vmatpush2.bf16.msra.mxu0 0
      %936 = vmatprep.subr.bf16.mxu0 0
      %937 = vmatpush2.bf16.msra.mxu0 0
      %938 = vmatprep.subr.bf16.mxu0 0
      %939 = vmatpush2.bf16.msra.mxu0 0
      %940 = vmatprep.subr.bf16.mxu0 0
      %941 = vmatpush2.bf16.msra.mxu0 0
      %942 = vmatprep.mubr.bf16.mxu0 0
      %943 = vmatmul.mubr.bf16.gmra.mxu0 %v902
      %v944 = vpop.f32.mrf.mxu0
      %v945 = vadd.f32 0.0, %v944
      %v946 = vpop.f32.mrf.mxu0
      %v947 = vadd.f32 0.0, %v946
      %v948 = vpop.f32.mrf.mxu0
      %v949 = vpop.f32.mrf.mxu0
      %950 = vdwg.mxu0
      %v951 = vadd.f32 %v893, %v945
      %v952 = vadd.f32 %v895, %v947
      %s953 = scalar_lea.vmem %s2, 44
      %v954 = vld [vmem:[%s953] sm:$0xf]
      %v956 = vsel %vm372, %v954, 0
      %v959 = vsel %vm376, %v343, 0
      %v962 = vsel %vm376, %v344, 0
      %964 = vmatprep.subr.bf16.mxu0 0
      %965 = vmatpush1.bf16.msra.mxu0 0
      %966 = vmatprep.subr.bf16.mxu0 0
      %967 = vmatpush1.bf16.msra.mxu0 0
      %968 = vmatprep.subr.bf16.mxu0 0
      %969 = vmatpush1.bf16.msra.mxu0 0
      %970 = vmatprep.subr.bf16.mxu0 0
      %971 = vmatpush1.bf16.msra.mxu0 0
      %972 = vmatprep.subr.bf16.mxu0 0
      %973 = vmatpush1.bf16.msra.mxu0 0
      %974 = vmatprep.subr.bf16.mxu0 0
      %975 = vmatpush1.bf16.msra.mxu0 0
      %976 = vmatprep.subr.bf16.mxu0 0
      %977 = vmatpush1.bf16.msra.mxu0 0
      %978 = vmatprep.subr.bf16.mxu0 %v962
      %979 = vmatpush1.bf16.msra.mxu0 %v959
      %980 = vmatprep.subr.bf16.mxu0 0
      %981 = vmatpush2.bf16.msra.mxu0 0
      %982 = vmatprep.subr.bf16.mxu0 0
      %983 = vmatpush2.bf16.msra.mxu0 0
      %984 = vmatprep.subr.bf16.mxu0 0
      %985 = vmatpush2.bf16.msra.mxu0 0
      %986 = vmatprep.subr.bf16.mxu0 0
      %987 = vmatpush2.bf16.msra.mxu0 0
      %988 = vmatprep.subr.bf16.mxu0 0
      %989 = vmatpush2.bf16.msra.mxu0 0
      %990 = vmatprep.subr.bf16.mxu0 0
      %991 = vmatpush2.bf16.msra.mxu0 0
      %992 = vmatprep.subr.bf16.mxu0 0
      %993 = vmatpush2.bf16.msra.mxu0 0
      %994 = vmatprep.subr.bf16.mxu0 0
      %995 = vmatpush2.bf16.msra.mxu0 0
      %996 = vmatprep.mubr.bf16.mxu0 0
      %997 = vmatmul.mubr.bf16.gmra.mxu0 %v956
      %v998 = vpop.f32.mrf.mxu0
      %v999 = vadd.f32 0.0, %v998
      %v1000 = vpop.f32.mrf.mxu0
      %v1001 = vadd.f32 0.0, %v1000
      %v1002 = vpop.f32.mrf.mxu0
      %v1003 = vpop.f32.mrf.mxu0
      %1004 = vdwg.mxu0
      %v1005 = vadd.f32 %v951, %v999
      %v1006 = vadd.f32 %v952, %v1001
      %s1007 = scalar_lea.vmem %s170, 32
      %1008 = vst [vmem:[%s1007] sm:$0xff] %v1005
      %1009 = vst [vmem:[%s1007 + $0x8] sm:$0xff] %v1006
      %v1010 = vadd.f32 %v1005, %v1006
      %1011 = vadd.xlane.f32.xlu0 %v1010
      %v1012 = vpop.xlane.xlu0 %1011
      %v1013 = vadd.f32 %v800, %v1012
      %v1014 = vmul.f32 %v1005, %v1005
      %v1015 = vmul.f32 %v1006, %v1006
      %v1016 = vadd.f32 %v1014, %v1015
      %1017 = vadd.xlane.f32.xlu0 %v1016
      %v1018 = vpop.xlane.xlu0 %1017
      %v1019 = vadd.f32 %v806, %v1018
      %s1020 = scalar_lea.vmem %s2, 48
      %v1021 = vld [vmem:[%s1020] sm:$0xf]
      %s1022 = scalar_lea.vmem %s2, 52
      %v1023 = vld [vmem:[%s1022] sm:$0xf]
      %v1025 = vsel %vm372, %v1023, 0
      %1027 = vmatprep.subr.bf16.mxu0 0
      %1028 = vmatpush1.bf16.msra.mxu0 0
      %1029 = vmatprep.subr.bf16.mxu0 0
      %1030 = vmatpush1.bf16.msra.mxu0 0
      %1031 = vmatprep.subr.bf16.mxu0 0
      %1032 = vmatpush1.bf16.msra.mxu0 0
      %1033 = vmatprep.subr.bf16.mxu0 0
      %1034 = vmatpush1.bf16.msra.mxu0 0
      %1035 = vmatprep.subr.bf16.mxu0 0
      %1036 = vmatpush1.bf16.msra.mxu0 0
      %1037 = vmatprep.subr.bf16.mxu0 0
      %1038 = vmatpush1.bf16.msra.mxu0 0
      %1039 = vmatprep.subr.bf16.mxu0 0
      %1040 = vmatpush1.bf16.msra.mxu0 0
      %1041 = vmatprep.subr.bf16.mxu0 %v749
      %1042 = vmatpush1.bf16.msra.mxu0 %v746
      %1043 = vmatprep.subr.bf16.mxu0 0
      %1044 = vmatpush2.bf16.msra.mxu0 0
      %1045 = vmatprep.subr.bf16.mxu0 0
      %1046 = vmatpush2.bf16.msra.mxu0 0
      %1047 = vmatprep.subr.bf16.mxu0 0
      %1048 = vmatpush2.bf16.msra.mxu0 0
      %1049 = vmatprep.subr.bf16.mxu0 0
      %1050 = vmatpush2.bf16.msra.mxu0 0
      %1051 = vmatprep.subr.bf16.mxu0 0
      %1052 = vmatpush2.bf16.msra.mxu0 0
      %1053 = vmatprep.subr.bf16.mxu0 0
      %1054 = vmatpush2.bf16.msra.mxu0 0
      %1055 = vmatprep.subr.bf16.mxu0 0
      %1056 = vmatpush2.bf16.msra.mxu0 0
      %1057 = vmatprep.subr.bf16.mxu0 0
      %1058 = vmatpush2.bf16.msra.mxu0 0
      %1059 = vmatprep.mubr.bf16.mxu0 0
      %1060 = vmatmul.mubr.bf16.gmra.mxu0 %v1025
      %v1061 = vpop.f32.mrf.mxu0
      %v1062 = vadd.f32 0.0, %v1061
      %v1063 = vpop.f32.mrf.mxu0
      %v1064 = vadd.f32 0.0, %v1063
      %v1065 = vpop.f32.mrf.mxu0
      %v1066 = vpop.f32.mrf.mxu0
      %1067 = vdwg.mxu0
      %v1069 = vsel %vm372, %v1021, 0
      %1071 = vmatprep.subr.bf16.mxu0 0
      %1072 = vmatpush1.bf16.msra.mxu0 0
      %1073 = vmatprep.subr.bf16.mxu0 0
      %1074 = vmatpush1.bf16.msra.mxu0 0
      %1075 = vmatprep.subr.bf16.mxu0 0
      %1076 = vmatpush1.bf16.msra.mxu0 0
      %1077 = vmatprep.subr.bf16.mxu0 0
      %1078 = vmatpush1.bf16.msra.mxu0 0
      %1079 = vmatprep.subr.bf16.mxu0 0
      %1080 = vmatpush1.bf16.msra.mxu0 0
      %1081 = vmatprep.subr.bf16.mxu0 0
      %1082 = vmatpush1.bf16.msra.mxu0 0
      %1083 = vmatprep.subr.bf16.mxu0 0
      %1084 = vmatpush1.bf16.msra.mxu0 0
      %1085 = vmatprep.subr.bf16.mxu0 %v537
      %1086 = vmatpush1.bf16.msra.mxu0 %v534
      %1087 = vmatprep.subr.bf16.mxu0 0
      %1088 = vmatpush2.bf16.msra.mxu0 0
      %1089 = vmatprep.subr.bf16.mxu0 0
      %1090 = vmatpush2.bf16.msra.mxu0 0
      %1091 = vmatprep.subr.bf16.mxu0 0
      %1092 = vmatpush2.bf16.msra.mxu0 0
      %1093 = vmatprep.subr.bf16.mxu0 0
      %1094 = vmatpush2.bf16.msra.mxu0 0
      %1095 = vmatprep.subr.bf16.mxu0 0
      %1096 = vmatpush2.bf16.msra.mxu0 0
      %1097 = vmatprep.subr.bf16.mxu0 0
      %1098 = vmatpush2.bf16.msra.mxu0 0
      %1099 = vmatprep.subr.bf16.mxu0 0
      %1100 = vmatpush2.bf16.msra.mxu0 0
      %1101 = vmatprep.subr.bf16.mxu0 0
      %1102 = vmatpush2.bf16.msra.mxu0 0
      %1103 = vmatprep.mubr.bf16.mxu0 0
      %1104 = vmatmul.mubr.bf16.gmra.mxu0 %v1069
      %v1105 = vpop.f32.mrf.mxu0
      %v1106 = vadd.f32 %v1062, %v1105
      %v1107 = vpop.f32.mrf.mxu0
      %v1108 = vadd.f32 %v1064, %v1107
      %v1109 = vpop.f32.mrf.mxu0
      %v1110 = vpop.f32.mrf.mxu0
      %1111 = vdwg.mxu0
      %s1112 = scalar_lea.vmem %s2, 56
      %v1113 = vld [vmem:[%s1112] sm:$0xf]
      %v1115 = vsel %vm372, %v1113, 0
      %1117 = vmatprep.subr.bf16.mxu0 0
      %1118 = vmatpush1.bf16.msra.mxu0 0
      %1119 = vmatprep.subr.bf16.mxu0 0
      %1120 = vmatpush1.bf16.msra.mxu0 0
      %1121 = vmatprep.subr.bf16.mxu0 0
      %1122 = vmatpush1.bf16.msra.mxu0 0
      %1123 = vmatprep.subr.bf16.mxu0 0
      %1124 = vmatpush1.bf16.msra.mxu0 0
      %1125 = vmatprep.subr.bf16.mxu0 0
      %1126 = vmatpush1.bf16.msra.mxu0 0
      %1127 = vmatprep.subr.bf16.mxu0 0
      %1128 = vmatpush1.bf16.msra.mxu0 0
      %1129 = vmatprep.subr.bf16.mxu0 0
      %1130 = vmatpush1.bf16.msra.mxu0 0
      %1131 = vmatprep.subr.bf16.mxu0 %v962
      %1132 = vmatpush1.bf16.msra.mxu0 %v959
      %1133 = vmatprep.subr.bf16.mxu0 0
      %1134 = vmatpush2.bf16.msra.mxu0 0
      %1135 = vmatprep.subr.bf16.mxu0 0
      %1136 = vmatpush2.bf16.msra.mxu0 0
      %1137 = vmatprep.subr.bf16.mxu0 0
      %1138 = vmatpush2.bf16.msra.mxu0 0
      %1139 = vmatprep.subr.bf16.mxu0 0
      %1140 = vmatpush2.bf16.msra.mxu0 0
      %1141 = vmatprep.subr.bf16.mxu0 0
      %1142 = vmatpush2.bf16.msra.mxu0 0
      %1143 = vmatprep.subr.bf16.mxu0 0
      %1144 = vmatpush2.bf16.msra.mxu0 0
      %1145 = vmatprep.subr.bf16.mxu0 0
      %1146 = vmatpush2.bf16.msra.mxu0 0
      %1147 = vmatprep.subr.bf16.mxu0 0
      %1148 = vmatpush2.bf16.msra.mxu0 0
      %1149 = vmatprep.mubr.bf16.mxu0 0
      %1150 = vmatmul.mubr.bf16.gmra.mxu0 %v1115
      %v1151 = vpop.f32.mrf.mxu0
      %v1152 = vadd.f32 0.0, %v1151
      %v1153 = vpop.f32.mrf.mxu0
      %v1154 = vadd.f32 0.0, %v1153
      %v1155 = vpop.f32.mrf.mxu0
      %v1156 = vpop.f32.mrf.mxu0
      %1157 = vdwg.mxu0
      %v1158 = vadd.f32 %v1106, %v1152
      %v1159 = vadd.f32 %v1108, %v1154
      %s1160 = scalar_lea.vmem %s2, 60
      %v1161 = vld [vmem:[%s1160] sm:$0xf]
      %v1163 = vsel %vm372, %v1161, 0
      %v1166 = vsel %vm376, %v367, 0
      %v1169 = vsel %vm376, %v368, 0
      %1171 = vmatprep.subr.bf16.mxu0 0
      %1172 = vmatpush1.bf16.msra.mxu0 0
      %1173 = vmatprep.subr.bf16.mxu0 0
      %1174 = vmatpush1.bf16.msra.mxu0 0
      %1175 = vmatprep.subr.bf16.mxu0 0
      %1176 = vmatpush1.bf16.msra.mxu0 0
      %1177 = vmatprep.subr.bf16.mxu0 0
      %1178 = vmatpush1.bf16.msra.mxu0 0
      %1179 = vmatprep.subr.bf16.mxu0 0
      %1180 = vmatpush1.bf16.msra.mxu0 0
      %1181 = vmatprep.subr.bf16.mxu0 0
      %1182 = vmatpush1.bf16.msra.mxu0 0
      %1183 = vmatprep.subr.bf16.mxu0 0
      %1184 = vmatpush1.bf16.msra.mxu0 0
      %1185 = vmatprep.subr.bf16.mxu0 %v1169
      %1186 = vmatpush1.bf16.msra.mxu0 %v1166
      %1187 = vmatprep.subr.bf16.mxu0 0
      %1188 = vmatpush2.bf16.msra.mxu0 0
      %1189 = vmatprep.subr.bf16.mxu0 0
      %1190 = vmatpush2.bf16.msra.mxu0 0
      %1191 = vmatprep.subr.bf16.mxu0 0
      %1192 = vmatpush2.bf16.msra.mxu0 0
      %1193 = vmatprep.subr.bf16.mxu0 0
      %1194 = vmatpush2.bf16.msra.mxu0 0
      %1195 = vmatprep.subr.bf16.mxu0 0
      %1196 = vmatpush2.bf16.msra.mxu0 0
      %1197 = vmatprep.subr.bf16.mxu0 0
      %1198 = vmatpush2.bf16.msra.mxu0 0
      %1199 = vmatprep.subr.bf16.mxu0 0
      %1200 = vmatpush2.bf16.msra.mxu0 0
      %1201 = vmatprep.subr.bf16.mxu0 0
      %1202 = vmatpush2.bf16.msra.mxu0 0
      %1203 = vmatprep.mubr.bf16.mxu0 0
      %1204 = vmatmul.mubr.bf16.gmra.mxu0 %v1163
      %v1205 = vpop.f32.mrf.mxu0
      %v1206 = vadd.f32 0.0, %v1205
      %v1207 = vpop.f32.mrf.mxu0
      %v1208 = vadd.f32 0.0, %v1207
      %v1209 = vpop.f32.mrf.mxu0
      %v1210 = vpop.f32.mrf.mxu0
      %1211 = vdwg.mxu0
      %v1212 = vadd.f32 %v1158, %v1206
      %v1213 = vadd.f32 %v1159, %v1208
      %s1214 = scalar_lea.vmem %s170, 48
      %1215 = vst [vmem:[%s1214] sm:$0xff] %v1212
      %1216 = vst [vmem:[%s1214 + $0x8] sm:$0xff] %v1213
      %v1217 = vadd.f32 %v1212, %v1213
      %1218 = vadd.xlane.f32.xlu0 %v1217
      %v1219 = vpop.xlane.xlu0 %1218
      %v1220 = vadd.f32 %v1013, %v1219
      %v1221 = vmul.f32 %v1212, %v1212
      %v1222 = vmul.f32 %v1213, %v1213
      %v1223 = vadd.f32 %v1221, %v1222
      %1224 = vadd.xlane.f32.xlu0 %v1223
      %v1225 = vpop.xlane.xlu0 %1224
      %v1226 = vadd.f32 %v1019, %v1225
      %v1227 = vmul.f32 %v1220, 0.0009765625
      %v1228 = vmul.f32 %v1226, 0.0009765625
      %v1229 = vmul.f32 %v1227, %v1227
      %v1230 = vsub.f32 %v1228, %v1229
      %v1231 = vadd.f32 %v1230, 1e-05
      %v1232 = vrsqrt.pop %v1231
      %v1233 = vld [vmem:[%s170] sm:$0xff]
      %v1234 = vld [vmem:[%s170 + $0x8] sm:$0xff]
      %v1235 = vsub.f32 %v1233, %v1227
      %v1236 = vsub.f32 %v1234, %v1227
      %v1237 = vmul.f32 %v1235, %v1232
      %v1238 = vmul.f32 %v1236, %v1232
      %v1239 = vmax.f32 %v1237, 0.0
      %v1240 = vmax.f32 %v1238, 0.0
      %1241 = vst [vmem:[%s170] sm:$0xff] %v1239
      %1242 = vst [vmem:[%s170 + $0x8] sm:$0xff] %v1240
      %v1243 = vld [vmem:[%s794] sm:$0xff]
      %v1244 = vld [vmem:[%s794 + $0x8] sm:$0xff]
      %v1245 = vsub.f32 %v1243, %v1227
      %v1246 = vsub.f32 %v1244, %v1227
      %v1247 = vmul.f32 %v1245, %v1232
      %v1248 = vmul.f32 %v1246, %v1232
      %v1249 = vmax.f32 %v1247, 0.0
      %v1250 = vmax.f32 %v1248, 0.0
      %1251 = vst [vmem:[%s794] sm:$0xff] %v1249
      %1252 = vst [vmem:[%s794 + $0x8] sm:$0xff] %v1250
      %v1253 = vld [vmem:[%s1007] sm:$0xff]
      %v1254 = vld [vmem:[%s1007 + $0x8] sm:$0xff]
      %v1255 = vsub.f32 %v1253, %v1227
      %v1256 = vsub.f32 %v1254, %v1227
      %v1257 = vmul.f32 %v1255, %v1232
      %v1258 = vmul.f32 %v1256, %v1232
      %v1259 = vmax.f32 %v1257, 0.0
      %v1260 = vmax.f32 %v1258, 0.0
      %1261 = vst [vmem:[%s1007] sm:$0xff] %v1259
      %1262 = vst [vmem:[%s1007 + $0x8] sm:$0xff] %v1260
      %v1263 = vld [vmem:[%s1214] sm:$0xff]
      %v1264 = vld [vmem:[%s1214 + $0x8] sm:$0xff]
      %v1265 = vsub.f32 %v1263, %v1227
      %v1266 = vsub.f32 %v1264, %v1227
      %v1267 = vmul.f32 %v1265, %v1232
      %v1268 = vmul.f32 %v1266, %v1232
      %v1269 = vmax.f32 %v1267, 0.0
      %v1270 = vmax.f32 %v1268, 0.0
      %1271 = vst [vmem:[%s1214] sm:$0xff] %v1269
      %1272 = vst [vmem:[%s1214 + $0x8] sm:$0xff] %v1270
      %p1273 = scmp.lt.s32.totalorder %s14, 1
      %s1274 = scalar_select %p1273, %s14, 1
      %s1275 = smul.addr %s1274, 8
      %s1276 = smul.addr %s1275, 8
      %s1277 = scalar_lea.vmem %s3, %s1276
      // Predicated region
      $region33: #{unet_up.1} parent=31 // pred_check
        %p1278 = pneg %p100
      $region34: #{unet_up.1} parent=31 // pred_check_branch
        %1280 = sbr.rel (%p1278) target = $region36
      $region35: #{unet_up.1} parent=31 // pred_region
        _
      $region36: #{unet_up.1} parent=31 // pred_fallthru
        _
    $region32: #{unet_up.1} parent=5 // pred_fallthru
      _
    %p1281 = scmp.le.s32.totalorder 2, %s9
    // Predicated region
    $region37: #{unet_up.1} parent=5 // pred_check
      %p1282 = pneg %p1281
    $region38: #{unet_up.1} parent=5 // pred_check_branch
      %1284 = sbr.rel (%p1282) target = $region40
    $region39: #{unet_up.1} parent=5 // pred_region
      %s1285 = ssub.s32 %s9, 2
      // Predicated region
      $region41: #{unet_up.1} parent=39 // pred_check
        %p1286 = pneg %p106
      $region42: #{unet_up.1} parent=39 // pred_check_branch
        %1288 = sbr.rel (%p1286) target = $region44
      $region43: #{unet_up.1} parent=39 // pred_region
        %p1289 = scmp.lt.s32.totalorder %s15, 1
        %s1290 = scalar_select %p1289, %s15, 1
        %s1291 = smul.addr %s1290, 8
        %s1292 = smul.addr %s1291, 8
        %s1293 = scalar_lea.vmem %s3, %s1292
      $region44: #{unet_up.1} parent=39 // pred_fallthru
        _
    $region40: #{unet_up.1} parent=5 // pred_fallthru
      _
  $region6: #{unet_up.1} parent=0 // loop_footer
    %s13 = sadd.s32 1, %s9
  $region7: #{unet_up.1} parent=0 // loop_footer_branch
    %8 = sbr.rel target = $region3
  $region8: #{unet_up.1} parent=0 // loop_exit
    _

</llo_original>
